<compile_context>
chip_gen: v6e
topology: v6e:2x2x1
jax: 0.10.0
libtpu: 0.0.40
codegen_flags: <defaults>
</compile_context>

<pallas_src>
import functools

import jax
import jax.numpy as jnp
import numpy as np
from jax import lax
from jax.experimental import pallas as pl
from jax.experimental.pallas import tpu as pltpu


def _layernorm(h, gamma, beta, eps=1e-5):
    mu = jnp.mean(h, axis=-1, keepdims=True)
    var = jnp.mean((h - mu) ** 2, axis=-1, keepdims=True)
    return (h - mu) * lax.rsqrt(var + eps) * gamma + beta


def block_kernel(xq_ref, xfull_ref, wq_ref, wkv_ref, wo_ref, bo_ref,
                 w1_ref, b1_ref, w2_ref, b2_ref,
                 g1_ref, be1_ref, g2_ref, be2_ref, out_ref,
                 *, n_head, head_size, tq):
    f32 = jnp.float32
    bf16 = jnp.bfloat16
    qi = pl.program_id(1)

    xq = xq_ref[0]                                      # (tq, C) f32, this query tile
    Tq, C = xq.shape
    H, hs = n_head, head_size
    tk = tq                                             # KV tile size == query tile size

    g1 = g1_ref[...]
    be1 = be1_ref[...]

    # ---- LayerNorm 1 (f32) + Q projection (1/sqrt(hs) pre-folded into wq) ----
    hq = _layernorm(xq, g1, be1)
    q = jnp.dot(hq.astype(bf16), wq_ref[...], preferred_element_type=f32)   # (tq, C)
    q = q.reshape(Tq, H, hs).astype(bf16)

    q_pos = qi * tq + lax.broadcasted_iota(jnp.int32, (Tq, 1), 0)

    # ---- flash-style online softmax over the causally-needed KV tiles only ----
    def kv_step(kv, carry):
        m, l, acc = carry
        start = pl.multiple_of(kv * tk, tk)
        x_kv = xfull_ref[0, pl.ds(start, tk), :]                            # (tk, C)
        h_kv = _layernorm(x_kv, g1, be1)
        kvp = jnp.dot(h_kv.astype(bf16), wkv_ref[...],
                      preferred_element_type=f32)                           # (tk, 2C)
        k = kvp[:, :C].reshape(tk, H, hs).astype(bf16)
        v = kvp[:, C:].reshape(tk, H, hs).astype(bf16)

        s = jnp.einsum("qhd,khd->hqk", q, k,
                       preferred_element_type=f32)                          # (H, tq, tk)
        k_pos = kv * tk + lax.broadcasted_iota(jnp.int32, (1, tk), 1)
        causal = k_pos <= q_pos                                             # (tq, tk)
        s = jnp.where(causal[None, :, :], s, f32(-1e30))   # finite mask (NaN-safe)

        m_new = jnp.maximum(m, jnp.max(s, axis=-1, keepdims=True))
        alpha = jnp.exp(m - m_new)
        p = jnp.exp(s - m_new)                                              # f32 exp
        l_new = alpha * l + jnp.sum(p, axis=-1, keepdims=True)              # f32 rowsum
        pv = jnp.einsum("hqk,khd->hqd", p.astype(bf16), v,
                        preferred_element_type=f32)                         # (H, tq, hs)
        acc_new = alpha * acc + pv
        return m_new, l_new, acc_new

    m0 = jnp.full((H, Tq, 1), -1e30, f32)
    l0 = jnp.zeros((H, Tq, 1), f32)
    a0 = jnp.zeros((H, Tq, hs), f32)
    # Causal tile skip: only tiles 0..qi are needed for this query tile.
    m, l, acc = lax.fori_loop(0, qi + 1, kv_step, (m0, l0, a0))

    out_h = acc * pl.reciprocal(l, approx=False)                            # (H, tq, hs)
    sa = jnp.dot(jnp.swapaxes(out_h, 0, 1).reshape(Tq, C).astype(bf16),
                 wo_ref[...], preferred_element_type=f32) + bo_ref[...]

    x1 = xq + sa                                        # residual 1 (f32)

    # ---- LayerNorm 2 + feed-forward on the same row tile ((tq,4C) intermediate) ----
    h2 = _layernorm(x1, g2_ref[...], be2_ref[...])
    ff = jnp.dot(h2.astype(bf16), w1_ref[...], preferred_element_type=f32) + b1_ref[...]
    ff = jnp.maximum(ff, 0.0).astype(bf16)              # bf16 right after bias+ReLU
    ff = jnp.dot(ff, w2_ref[...], preferred_element_type=f32) + b2_ref[...]

    out_ref[0] = x1 + ff                                # residual 2


def prepare_block_params(params, *, n_head):
    """One-time weight prep (hoisted out of the per-call hot path)."""
    C = params["wq"].shape[0]
    head_size = C // n_head
    scale = 1.0 / (head_size ** 0.5)
    bf16 = jnp.bfloat16
    wq = (params["wq"] * scale).astype(bf16)            # fold softmax scale into Q proj
    wkv = jnp.concatenate([params["wk"], params["wv"]], axis=1).astype(bf16)
    return (
        wq, wkv, params["wo"].astype(bf16), params["bo"],
        params["w1"].astype(bf16), params["b1"],
        params["w2"].astype(bf16), params["b2"],
        params["g1"], params["be1"], params["g2"], params["be2"],
    )


def block_forward(x, prepared_weights, *, n_head):
    B, T, C = x.shape
    head_size = C // n_head

    # Query-tile size: 256-aligned for the 2x256x256 MXU on v6e/v7x, 128 fallback,
    # else full T (small / non-divisible sequences, e.g. the toy case).
    tq = T
    for cand in (256, 128):
        if T >= cand and T % cand == 0:
            tq = cand
            break
    nq = T // tq

    kernel = functools.partial(block_kernel, n_head=n_head,
                               head_size=head_size, tq=tq)

    def weight_spec(a):
        # Constant index_map across the whole grid -> single-buffer (halves resident
        # weight VMEM; the difference between fitting and not fitting on v7x).
        idx = lambda b, qi: (0,) * a.ndim
        try:
            return pl.BlockSpec(a.shape, idx, pipeline_mode=pl.Buffered(1))
        except Exception:
            return pl.BlockSpec(a.shape, idx)

    # Generation-aware VMEM budget: ~85% of physical capacity.
    try:
        vmem_cap = int(pltpu.get_tpu_info().vmem_capacity_bytes)
    except Exception:
        vmem_cap = 64 * 2 ** 20
    vmem_limit = max(int(0.85 * vmem_cap), 16 * 2 ** 20)

    return pl.pallas_call(
        kernel,
        out_shape=jax.ShapeDtypeStruct((B, T, C), jnp.float32),
        grid_spec=pltpu.PrefetchScalarGridSpec(
            num_scalar_prefetch=0,
            grid=(B, nq),
            in_specs=[
                pl.BlockSpec((1, tq, C), lambda b, qi: (b, qi, 0)),  # query-tile view
                pl.BlockSpec((1, T, C), lambda b, qi: (b, 0, 0)),    # full-seq view (K/V)
            ] + [weight_spec(a) for a in prepared_weights],
            out_specs=pl.BlockSpec((1, tq, C), lambda b, qi: (b, qi, 0)),
        ),
        compiler_params=pltpu.CompilerParams(
            dimension_semantics=("parallel", "parallel"),   # shards across v7x megacore
            vmem_limit_bytes=vmem_limit,
        ),
    )(x, x, *prepared_weights)


def block_reference(x, params, *, n_head):
    """Pure-JAX f32 reference for verification."""
    B, T, C = x.shape
    hs = C // n_head

    def ln(h, g, b):
        mu = jnp.mean(h, axis=-1, keepdims=True)
        var = jnp.mean((h - mu) ** 2, axis=-1, keepdims=True)
        return (h - mu) / jnp.sqrt(var + 1e-5) * g + b

    h = ln(x, params["g1"], params["be1"])
    q = h @ params["wq"]; k = h @ params["wk"]; v = h @ params["wv"]
    q = q.reshape(B, T, n_head, hs).transpose(0, 2, 1, 3)
    k = k.reshape(B, T, n_head, hs).transpose(0, 2, 1, 3)
    v = v.reshape(B, T, n_head, hs).transpose(0, 2, 1, 3)
    att = jnp.einsum("bhqd,bhkd->bhqk", q, k) / (hs ** 0.5)
    mask = jnp.tril(jnp.ones((T, T), dtype=bool))
    att = jnp.where(mask, att, -jnp.inf)
    att = jax.nn.softmax(att, axis=-1)
    sa = jnp.einsum("bhqk,bhkd->bhqd", att, v).transpose(0, 2, 1, 3).reshape(B, T, C)
    sa = sa @ params["wo"] + params["bo"]
    x1 = x + sa
    h2 = ln(x1, params["g2"], params["be2"])
    ff = jnp.maximum(h2 @ params["w1"] + params["b1"], 0.0) @ params["w2"] + params["b2"]
    return x1 + ff


def init_params(key, n_embd, n_head):
    C = n_embd
    ks = jax.random.split(key, 8)
    s = 0.02
    return {
        "wq": jax.random.normal(ks[0], (C, C), jnp.float32) * s,
        "wk": jax.random.normal(ks[1], (C, C), jnp.float32) * s,
        "wv": jax.random.normal(ks[2], (C, C), jnp.float32) * s,
        "wo": jax.random.normal(ks[3], (C, C), jnp.float32) * s,
        "bo": jax.random.normal(ks[4], (1, C), jnp.float32) * s,
        "w1": jax.random.normal(ks[5], (C, 4 * C), jnp.float32) * s,
        "b1": jax.random.normal(ks[6], (1, 4 * C), jnp.float32) * s,
        "w2": jax.random.normal(ks[7], (4 * C, C), jnp.float32) * s,
        "b2": jnp.zeros((1, C), jnp.float32),
        "g1": jnp.ones((1, C), jnp.float32),
        "be1": jnp.zeros((1, C), jnp.float32),
        "g2": jnp.ones((1, C), jnp.float32),
        "be2": jnp.zeros((1, C), jnp.float32),
    }


if __name__ == "__main__":
    B, T, C, n_head = 2, 8, 32, 4
    key = jax.random.PRNGKey(0)
    k_x, k_p = jax.random.split(key)
    x = jax.random.normal(k_x, (B, T, C), jnp.float32)
    params = init_params(k_p, C, n_head)

    prepared = prepare_block_params(params, n_head=n_head)   # one-time weight prep
    out = block_forward(x, prepared, n_head=n_head)
    out = jax.block_until_ready(out)

    ref = block_reference(x, params, n_head=n_head)
    # bf16 MXU inputs -> bf16-appropriate tolerance vs. the f32 reference.
    np.testing.assert_allclose(np.asarray(out), np.asarray(ref), rtol=2e-2, atol=2e-2)
    print("KERNEL_OK")
</pallas_src>

<mosaic_0001>
module attributes {stable_mosaic.version = 11 : i64} {
  func.func @block_kernel(%arg0: i32, %arg1: i32, %arg2: memref<1x8x32xf32, #tpu.memory_space<vmem>>, %arg3: memref<1x8x32xf32, #tpu.memory_space<vmem>>, %arg4: memref<32x32xbf16, #tpu.memory_space<vmem>>, %arg5: memref<32x64xbf16, #tpu.memory_space<vmem>>, %arg6: memref<32x32xbf16, #tpu.memory_space<vmem>>, %arg7: memref<1x32xf32, #tpu.memory_space<vmem>>, %arg8: memref<32x128xbf16, #tpu.memory_space<vmem>>, %arg9: memref<1x128xf32, #tpu.memory_space<vmem>>, %arg10: memref<128x32xbf16, #tpu.memory_space<vmem>>, %arg11: memref<1x32xf32, #tpu.memory_space<vmem>>, %arg12: memref<1x32xf32, #tpu.memory_space<vmem>>, %arg13: memref<1x32xf32, #tpu.memory_space<vmem>>, %arg14: memref<1x32xf32, #tpu.memory_space<vmem>>, %arg15: memref<1x32xf32, #tpu.memory_space<vmem>>, %arg16: memref<1x8x32xf32, #tpu.memory_space<vmem>>) attributes {dimension_semantics = [#tpu.dimension_semantics<parallel>, #tpu.dimension_semantics<parallel>], iteration_bounds = array<i64: 2, 1>, scalar_prefetch = 0 : i64, scratch_operands = 0 : i64, tpu.core_type = #tpu.core_type<tc>, window_params = [{transform_indices = @transform_0, window_bounds = array<i64: 1, 8, 32>}, {transform_indices = @transform_1, window_bounds = array<i64: 1, 8, 32>}, {pipeline_mode = #tpu.pipeline_mode<synchronous>, transform_indices = @transform_2, window_bounds = array<i64: 32, 32>}, {pipeline_mode = #tpu.pipeline_mode<synchronous>, transform_indices = @transform_3, window_bounds = array<i64: 32, 64>}, {pipeline_mode = #tpu.pipeline_mode<synchronous>, transform_indices = @transform_4, window_bounds = array<i64: 32, 32>}, {pipeline_mode = #tpu.pipeline_mode<synchronous>, transform_indices = @transform_5, window_bounds = array<i64: 1, 32>}, {pipeline_mode = #tpu.pipeline_mode<synchronous>, transform_indices = @transform_6, window_bounds = array<i64: 32, 128>}, {pipeline_mode = #tpu.pipeline_mode<synchronous>, transform_indices = @transform_7, window_bounds = array<i64: 1, 128>}, {pipeline_mode = #tpu.pipeline_mode<synchronous>, transform_indices = @transform_8, window_bounds = array<i64: 128, 32>}, {pipeline_mode = #tpu.pipeline_mode<synchronous>, transform_indices = @transform_9, window_bounds = array<i64: 1, 32>}, {pipeline_mode = #tpu.pipeline_mode<synchronous>, transform_indices = @transform_10, window_bounds = array<i64: 1, 32>}, {pipeline_mode = #tpu.pipeline_mode<synchronous>, transform_indices = @transform_11, window_bounds = array<i64: 1, 32>}, {pipeline_mode = #tpu.pipeline_mode<synchronous>, transform_indices = @transform_12, window_bounds = array<i64: 1, 32>}, {pipeline_mode = #tpu.pipeline_mode<synchronous>, transform_indices = @transform_13, window_bounds = array<i64: 1, 32>}, {transform_indices = @transform_14, window_bounds = array<i64: 1, 8, 32>}]} {
    %c0 = arith.constant 0 : index
    %c0_0 = arith.constant 0 : index
    %c0_1 = arith.constant 0 : index
    %0 = vector.load %arg2[%c0, %c0_0, %c0_1] : memref<1x8x32xf32, #tpu.memory_space<vmem>>, vector<1x8x32xf32>
    %1 = vector.shape_cast %0 : vector<1x8x32xf32> to vector<8x32xf32>
    %c0_2 = arith.constant 0 : index
    %c0_3 = arith.constant 0 : index
    %2 = vector.load %arg12[%c0_2, %c0_3] : memref<1x32xf32, #tpu.memory_space<vmem>>, vector<1x32xf32>
    %c0_4 = arith.constant 0 : index
    %c0_5 = arith.constant 0 : index
    %3 = vector.load %arg13[%c0_4, %c0_5] : memref<1x32xf32, #tpu.memory_space<vmem>>, vector<1x32xf32>
    %cst = arith.constant dense<0.000000e+00> : vector<8xf32>
    %4 = vector.multi_reduction <add>, %1, %cst [1] : vector<8x32xf32> to vector<8xf32>
    %5 = vector.shape_cast %4 : vector<8xf32> to vector<8x1xf32>
    %cst_6 = arith.constant 3.200000e+01 : f32
    %6 = vector.broadcast %cst_6 : f32 to vector<8x1xf32>
    %7 = arith.divf %5, %6 : vector<8x1xf32>
    %8 = vector.broadcast %7 : vector<8x1xf32> to vector<8x32xf32>
    %9 = arith.subf %1, %8 : vector<8x32xf32>
    %10 = arith.mulf %9, %9 : vector<8x32xf32>
    %cst_7 = arith.constant dense<0.000000e+00> : vector<8xf32>
    %11 = vector.multi_reduction <add>, %10, %cst_7 [1] : vector<8x32xf32> to vector<8xf32>
    %12 = vector.shape_cast %11 : vector<8xf32> to vector<8x1xf32>
    %cst_8 = arith.constant 3.200000e+01 : f32
    %13 = vector.broadcast %cst_8 : f32 to vector<8x1xf32>
    %14 = arith.divf %12, %13 : vector<8x1xf32>
    %15 = vector.broadcast %7 : vector<8x1xf32> to vector<8x32xf32>
    %16 = arith.subf %1, %15 : vector<8x32xf32>
    %cst_9 = arith.constant 9.99999974E-6 : f32
    %17 = vector.broadcast %cst_9 : f32 to vector<8x1xf32>
    %18 = arith.addf %14, %17 : vector<8x1xf32>
    %19 = math.rsqrt %18 : vector<8x1xf32>
    %20 = vector.broadcast %19 : vector<8x1xf32> to vector<8x32xf32>
    %21 = arith.mulf %16, %20 : vector<8x32xf32>
    %22 = vector.broadcast %2 : vector<1x32xf32> to vector<8x32xf32>
    %23 = arith.mulf %21, %22 : vector<8x32xf32>
    %24 = vector.broadcast %3 : vector<1x32xf32> to vector<8x32xf32>
    %25 = arith.addf %23, %24 : vector<8x32xf32>
    %26 = arith.truncf %25 : vector<8x32xf32> to vector<8x32xbf16>
    %c0_10 = arith.constant 0 : index
    %c0_11 = arith.constant 0 : index
    %27 = vector.load %arg4[%c0_10, %c0_11] : memref<32x32xbf16, #tpu.memory_space<vmem>>, vector<32x32xbf16>
    %cst_12 = arith.constant dense<0.000000e+00> : vector<8x32xf32>
    %28 = tpu.matmul %26, %27, %cst_12 {dimension_numbers = #tpu.dot_dimension_numbers<[1], [0], [0], [1], [0, 0, 1, 1], [], []>} : vector<8x32xbf16>, vector<32x32xbf16>, vector<8x32xf32> -> vector<8x32xf32>
    %29 = vector.shape_cast %28 : vector<8x32xf32> to vector<8x4x8xf32>
    %30 = arith.truncf %29 : vector<8x4x8xf32> to vector<8x4x8xbf16>
    %c8_i32 = arith.constant 8 : i32
    %31 = arith.muli %arg1, %c8_i32 : i32
    %32 = tpu.iota {dimensions = array<i32: 0>} : vector<8x1xi32>
    %33 = vector.broadcast %31 : i32 to vector<8x1xi32>
    %34 = arith.addi %33, %32 : vector<8x1xi32>
    %cst_13 = arith.constant -1.000000e+30 : f32
    %35 = vector.broadcast %cst_13 : f32 to vector<4x8x1xf32>
    %cst_14 = arith.constant 0.000000e+00 : f32
    %36 = vector.broadcast %cst_14 : f32 to vector<4x8x1xf32>
    %cst_15 = arith.constant 0.000000e+00 : f32
    %37 = vector.broadcast %cst_15 : f32 to vector<4x8x8xf32>
    %c1_i32 = arith.constant 1 : i32
    %38 = arith.addi %arg1, %c1_i32 : i32
    %c0_i32 = arith.constant 0 : i32
    %39 = arith.subi %38, %c0_i32 : i32
    %40 = arith.addi %c0_i32, %39 : i32
    %c1_i32_16 = arith.constant 1 : i32
    %41:3 = scf.for %arg17 = %c0_i32 to %40 step %c1_i32_16 iter_args(%arg18 = %35, %arg19 = %36, %arg20 = %37) -> (vector<4x8x1xf32>, vector<4x8x1xf32>, vector<4x8x8xf32>)  : i32 {
      %c8_i32_45 = arith.constant 8 : i32
      %96 = arith.muli %arg17, %c8_i32_45 : i32
      %97 = tpu.assume_multiple %96, 8 : i32
      %c0_46 = arith.constant 0 : index
      %98 = arith.index_cast %97 : i32 to index
      %c0_47 = arith.constant 0 : index
      %99 = vector.load %arg3[%c0_46, %98, %c0_47] : memref<1x8x32xf32, #tpu.memory_space<vmem>>, vector<1x8x32xf32>
      %100 = vector.shape_cast %99 : vector<1x8x32xf32> to vector<8x32xf32>
      %cst_48 = arith.constant dense<0.000000e+00> : vector<8xf32>
      %101 = vector.multi_reduction <add>, %100, %cst_48 [1] : vector<8x32xf32> to vector<8xf32>
      %102 = vector.shape_cast %101 : vector<8xf32> to vector<8x1xf32>
      %cst_49 = arith.constant 3.200000e+01 : f32
      %103 = vector.broadcast %cst_49 : f32 to vector<8x1xf32>
      %104 = arith.divf %102, %103 : vector<8x1xf32>
      %105 = vector.broadcast %104 : vector<8x1xf32> to vector<8x32xf32>
      %106 = arith.subf %100, %105 : vector<8x32xf32>
      %107 = arith.mulf %106, %106 : vector<8x32xf32>
      %cst_50 = arith.constant dense<0.000000e+00> : vector<8xf32>
      %108 = vector.multi_reduction <add>, %107, %cst_50 [1] : vector<8x32xf32> to vector<8xf32>
      %109 = vector.shape_cast %108 : vector<8xf32> to vector<8x1xf32>
      %cst_51 = arith.constant 3.200000e+01 : f32
      %110 = vector.broadcast %cst_51 : f32 to vector<8x1xf32>
      %111 = arith.divf %109, %110 : vector<8x1xf32>
      %112 = vector.broadcast %104 : vector<8x1xf32> to vector<8x32xf32>
      %113 = arith.subf %100, %112 : vector<8x32xf32>
      %cst_52 = arith.constant 9.99999974E-6 : f32
      %114 = vector.broadcast %cst_52 : f32 to vector<8x1xf32>
      %115 = arith.addf %111, %114 : vector<8x1xf32>
      %116 = math.rsqrt %115 : vector<8x1xf32>
      %117 = vector.broadcast %116 : vector<8x1xf32> to vector<8x32xf32>
      %118 = arith.mulf %113, %117 : vector<8x32xf32>
      %119 = vector.broadcast %2 : vector<1x32xf32> to vector<8x32xf32>
      %120 = arith.mulf %118, %119 : vector<8x32xf32>
      %121 = vector.broadcast %3 : vector<1x32xf32> to vector<8x32xf32>
      %122 = arith.addf %120, %121 : vector<8x32xf32>
      %123 = arith.truncf %122 : vector<8x32xf32> to vector<8x32xbf16>
      %c0_53 = arith.constant 0 : index
      %c0_54 = arith.constant 0 : index
      %124 = vector.load %arg5[%c0_53, %c0_54] : memref<32x64xbf16, #tpu.memory_space<vmem>>, vector<32x64xbf16>
      %cst_55 = arith.constant dense<0.000000e+00> : vector<8x64xf32>
      %125 = tpu.matmul %123, %124, %cst_55 {dimension_numbers = #tpu.dot_dimension_numbers<[1], [0], [0], [1], [0, 0, 1, 1], [], []>} : vector<8x32xbf16>, vector<32x64xbf16>, vector<8x64xf32> -> vector<8x64xf32>
      %126 = vector.extract_strided_slice %125 {offsets = [0, 0], sizes = [8, 32], strides = [1, 1]} : vector<8x64xf32> to vector<8x32xf32>
      %127 = vector.shape_cast %126 : vector<8x32xf32> to vector<8x4x8xf32>
      %128 = arith.truncf %127 : vector<8x4x8xf32> to vector<8x4x8xbf16>
      %129 = vector.extract_strided_slice %125 {offsets = [0, 32], sizes = [8, 32], strides = [1, 1]} : vector<8x64xf32> to vector<8x32xf32>
      %130 = vector.shape_cast %129 : vector<8x32xf32> to vector<8x4x8xf32>
      %131 = arith.truncf %130 : vector<8x4x8xf32> to vector<8x4x8xbf16>
      "tpu.trace_start"() <{level = 10 : i32, message = "qhd,khd->hqk"}> : () -> ()
      %cst_56 = arith.constant dense<0.000000e+00> : vector<4x8x8xf32>
      %132 = tpu.matmul %30, %128, %cst_56 {dimension_numbers = #tpu.dot_dimension_numbers<[2], [2], [0], [0], [0, 1, 0, 0, 1, 0], [1], [1]>} : vector<8x4x8xbf16>, vector<8x4x8xbf16>, vector<4x8x8xf32> -> vector<4x8x8xf32>
      "tpu.trace_stop"() : () -> ()
      %c8_i32_57 = arith.constant 8 : i32
      %133 = arith.muli %arg17, %c8_i32_57 : i32
      %134 = tpu.iota {dimensions = array<i32: 1>} : vector<1x8xi32>
      %135 = vector.broadcast %133 : i32 to vector<1x8xi32>
      %136 = arith.addi %135, %134 : vector<1x8xi32>
      %137 = vector.broadcast %136 : vector<1x8xi32> to vector<8x8xi32>
      %138 = vector.broadcast %34 : vector<8x1xi32> to vector<8x8xi32>
      %139 = arith.cmpi sle, %137, %138 : vector<8x8xi32>
      %140 = vector.shape_cast %139 : vector<8x8xi1> to vector<1x8x8xi1>
      %cst_58 = arith.constant -1.000000e+30 : f32
      %141 = vector.shape_cast %140 : vector<1x8x8xi1> to vector<1x8x8xi1>
      %142 = vector.broadcast %141 : vector<1x8x8xi1> to vector<4x8x8xi1>
      %143 = vector.broadcast %cst_58 : f32 to vector<4x8x8xf32>
      %144 = arith.select %142, %132, %143 : vector<4x8x8xi1>, vector<4x8x8xf32>
      %cst_59 = arith.constant dense<0xFF800000> : vector<4x8xf32>
      %145 = vector.multi_reduction <maximumf>, %144, %cst_59 [2] : vector<4x8x8xf32> to vector<4x8xf32>
      %146 = vector.shape_cast %145 : vector<4x8xf32> to vector<4x8x1xf32>
      %147 = arith.maximumf %arg18, %146 : vector<4x8x1xf32>
      %148 = arith.subf %arg18, %147 : vector<4x8x1xf32>
      %149 = math.exp %148 : vector<4x8x1xf32>
      %150 = vector.broadcast %147 : vector<4x8x1xf32> to vector<4x8x8xf32>
      %151 = arith.subf %144, %150 : vector<4x8x8xf32>
      %152 = math.exp %151 : vector<4x8x8xf32>
      %153 = arith.mulf %149, %arg19 : vector<4x8x1xf32>
      %cst_60 = arith.constant dense<0.000000e+00> : vector<4x8xf32>
      %154 = vector.multi_reduction <add>, %152, %cst_60 [2] : vector<4x8x8xf32> to vector<4x8xf32>
      %155 = vector.shape_cast %154 : vector<4x8xf32> to vector<4x8x1xf32>
      %156 = arith.addf %153, %155 : vector<4x8x1xf32>
      %157 = arith.truncf %152 : vector<4x8x8xf32> to vector<4x8x8xbf16>
      "tpu.trace_start"() <{level = 10 : i32, message = "hqk,khd->hqd"}> : () -> ()
      %cst_61 = arith.constant dense<0.000000e+00> : vector<4x8x8xf32>
      %158 = tpu.matmul %157, %131, %cst_61 {dimension_numbers = #tpu.dot_dimension_numbers<[2], [0], [1], [2], [0, 0, 0, 1, 1, 2], [0], [1]>} : vector<4x8x8xbf16>, vector<8x4x8xbf16>, vector<4x8x8xf32> -> vector<4x8x8xf32>
      "tpu.trace_stop"() : () -> ()
      %159 = vector.broadcast %149 : vector<4x8x1xf32> to vector<4x8x8xf32>
      %160 = arith.mulf %159, %arg20 : vector<4x8x8xf32>
      %161 = arith.addf %160, %158 : vector<4x8x8xf32>
      scf.yield %147, %156, %161 : vector<4x8x1xf32>, vector<4x8x1xf32>, vector<4x8x8xf32>
    }
    %42 = tpu.reciprocal %41#1 : vector<4x8x1xf32> -> vector<4x8x1xf32>
    %43 = vector.broadcast %42 : vector<4x8x1xf32> to vector<4x8x8xf32>
    %44 = arith.mulf %41#2, %43 : vector<4x8x8xf32>
    %45 = tpu.transpose %44, [1, 0, 2] : vector<4x8x8xf32> -> vector<8x4x8xf32>
    %46 = vector.shape_cast %45 : vector<8x4x8xf32> to vector<8x32xf32>
    %47 = arith.truncf %46 : vector<8x32xf32> to vector<8x32xbf16>
    %c0_17 = arith.constant 0 : index
    %c0_18 = arith.constant 0 : index
    %48 = vector.load %arg6[%c0_17, %c0_18] : memref<32x32xbf16, #tpu.memory_space<vmem>>, vector<32x32xbf16>
    %cst_19 = arith.constant dense<0.000000e+00> : vector<8x32xf32>
    %49 = tpu.matmul %47, %48, %cst_19 {dimension_numbers = #tpu.dot_dimension_numbers<[1], [0], [0], [1], [0, 0, 1, 1], [], []>} : vector<8x32xbf16>, vector<32x32xbf16>, vector<8x32xf32> -> vector<8x32xf32>
    %c0_20 = arith.constant 0 : index
    %c0_21 = arith.constant 0 : index
    %50 = vector.load %arg7[%c0_20, %c0_21] : memref<1x32xf32, #tpu.memory_space<vmem>>, vector<1x32xf32>
    %51 = vector.broadcast %50 : vector<1x32xf32> to vector<8x32xf32>
    %52 = arith.addf %49, %51 : vector<8x32xf32>
    %53 = arith.addf %1, %52 : vector<8x32xf32>
    %c0_22 = arith.constant 0 : index
    %c0_23 = arith.constant 0 : index
    %54 = vector.load %arg14[%c0_22, %c0_23] : memref<1x32xf32, #tpu.memory_space<vmem>>, vector<1x32xf32>
    %c0_24 = arith.constant 0 : index
    %c0_25 = arith.constant 0 : index
    %55 = vector.load %arg15[%c0_24, %c0_25] : memref<1x32xf32, #tpu.memory_space<vmem>>, vector<1x32xf32>
    %cst_26 = arith.constant dense<0.000000e+00> : vector<8xf32>
    %56 = vector.multi_reduction <add>, %53, %cst_26 [1] : vector<8x32xf32> to vector<8xf32>
    %57 = vector.shape_cast %56 : vector<8xf32> to vector<8x1xf32>
    %cst_27 = arith.constant 3.200000e+01 : f32
    %58 = vector.broadcast %cst_27 : f32 to vector<8x1xf32>
    %59 = arith.divf %57, %58 : vector<8x1xf32>
    %60 = vector.broadcast %59 : vector<8x1xf32> to vector<8x32xf32>
    %61 = arith.subf %53, %60 : vector<8x32xf32>
    %62 = arith.mulf %61, %61 : vector<8x32xf32>
    %cst_28 = arith.constant dense<0.000000e+00> : vector<8xf32>
    %63 = vector.multi_reduction <add>, %62, %cst_28 [1] : vector<8x32xf32> to vector<8xf32>
    %64 = vector.shape_cast %63 : vector<8xf32> to vector<8x1xf32>
    %cst_29 = arith.constant 3.200000e+01 : f32
    %65 = vector.broadcast %cst_29 : f32 to vector<8x1xf32>
    %66 = arith.divf %64, %65 : vector<8x1xf32>
    %67 = vector.broadcast %59 : vector<8x1xf32> to vector<8x32xf32>
    %68 = arith.subf %53, %67 : vector<8x32xf32>
    %cst_30 = arith.constant 9.99999974E-6 : f32
    %69 = vector.broadcast %cst_30 : f32 to vector<8x1xf32>
    %70 = arith.addf %66, %69 : vector<8x1xf32>
    %71 = math.rsqrt %70 : vector<8x1xf32>
    %72 = vector.broadcast %71 : vector<8x1xf32> to vector<8x32xf32>
    %73 = arith.mulf %68, %72 : vector<8x32xf32>
    %74 = vector.broadcast %54 : vector<1x32xf32> to vector<8x32xf32>
    %75 = arith.mulf %73, %74 : vector<8x32xf32>
    %76 = vector.broadcast %55 : vector<1x32xf32> to vector<8x32xf32>
    %77 = arith.addf %75, %76 : vector<8x32xf32>
    %78 = arith.truncf %77 : vector<8x32xf32> to vector<8x32xbf16>
    %c0_31 = arith.constant 0 : index
    %c0_32 = arith.constant 0 : index
    %79 = vector.load %arg8[%c0_31, %c0_32] : memref<32x128xbf16, #tpu.memory_space<vmem>>, vector<32x128xbf16>
    %cst_33 = arith.constant dense<0.000000e+00> : vector<8x128xf32>
    %80 = tpu.matmul %78, %79, %cst_33 {dimension_numbers = #tpu.dot_dimension_numbers<[1], [0], [0], [1], [0, 0, 1, 1], [], []>} : vector<8x32xbf16>, vector<32x128xbf16>, vector<8x128xf32> -> vector<8x128xf32>
    %c0_34 = arith.constant 0 : index
    %c0_35 = arith.constant 0 : index
    %81 = vector.load %arg9[%c0_34, %c0_35] : memref<1x128xf32, #tpu.memory_space<vmem>>, vector<1x128xf32>
    %82 = vector.broadcast %81 : vector<1x128xf32> to vector<8x128xf32>
    %83 = arith.addf %80, %82 : vector<8x128xf32>
    %cst_36 = arith.constant 0.000000e+00 : f32
    %84 = vector.broadcast %cst_36 : f32 to vector<8x128xf32>
    %85 = arith.maximumf %83, %84 : vector<8x128xf32>
    %86 = arith.truncf %85 : vector<8x128xf32> to vector<8x128xbf16>
    %c0_37 = arith.constant 0 : index
    %c0_38 = arith.constant 0 : index
    %87 = vector.load %arg10[%c0_37, %c0_38] : memref<128x32xbf16, #tpu.memory_space<vmem>>, vector<128x32xbf16>
    %cst_39 = arith.constant dense<0.000000e+00> : vector<8x32xf32>
    %88 = tpu.matmul %86, %87, %cst_39 {dimension_numbers = #tpu.dot_dimension_numbers<[1], [0], [0], [1], [0, 0, 1, 1], [], []>} : vector<8x128xbf16>, vector<128x32xbf16>, vector<8x32xf32> -> vector<8x32xf32>
    %c0_40 = arith.constant 0 : index
    %c0_41 = arith.constant 0 : index
    %89 = vector.load %arg11[%c0_40, %c0_41] : memref<1x32xf32, #tpu.memory_space<vmem>>, vector<1x32xf32>
    %90 = vector.broadcast %89 : vector<1x32xf32> to vector<8x32xf32>
    %91 = arith.addf %88, %90 : vector<8x32xf32>
    %92 = arith.addf %53, %91 : vector<8x32xf32>
    %c0_42 = arith.constant 0 : index
    %c0_43 = arith.constant 0 : index
    %c0_44 = arith.constant 0 : index
    %93 = vector.load %arg16[%c0_42, %c0_43, %c0_44] : memref<1x8x32xf32, #tpu.memory_space<vmem>>, vector<1x8x32xf32>
    %94 = vector.shape_cast %93 : vector<1x8x32xf32> to vector<8x32xf32>
    %95 = vector.shape_cast %92 : vector<8x32xf32> to vector<1x8x32xf32>
    tpu.vector_store %arg16[%c0_42, %c0_43, %c0_44], %95 {strides = array<i32>} : memref<1x8x32xf32, #tpu.memory_space<vmem>>, vector<1x8x32xf32>,
    return
  }
  func.func @transform_0(%arg0: i32, %arg1: i32) -> (i32, i32, i32) {
    %c0_i32 = arith.constant 0 : i32
    %c0_i32_0 = arith.constant 0 : i32
    return %arg0, %arg1, %c0_i32 : i32, i32, i32
  }
  func.func @transform_1(%arg0: i32, %arg1: i32) -> (i32, i32, i32) {
    %c0_i32 = arith.constant 0 : i32
    %c0_i32_0 = arith.constant 0 : i32
    %c0_i32_1 = arith.constant 0 : i32
    return %arg0, %c0_i32, %c0_i32_0 : i32, i32, i32
  }
  func.func @transform_2(%arg0: i32, %arg1: i32) -> (i32, i32) {
    %c0_i32 = arith.constant 0 : i32
    %c0_i32_0 = arith.constant 0 : i32
    %c0_i32_1 = arith.constant 0 : i32
    return %c0_i32, %c0_i32_0 : i32, i32
  }
  func.func @transform_3(%arg0: i32, %arg1: i32) -> (i32, i32) {
    %c0_i32 = arith.constant 0 : i32
    %c0_i32_0 = arith.constant 0 : i32
    %c0_i32_1 = arith.constant 0 : i32
    return %c0_i32, %c0_i32_0 : i32, i32
  }
  func.func @transform_4(%arg0: i32, %arg1: i32) -> (i32, i32) {
    %c0_i32 = arith.constant 0 : i32
    %c0_i32_0 = arith.constant 0 : i32
    %c0_i32_1 = arith.constant 0 : i32
    return %c0_i32, %c0_i32_0 : i32, i32
  }
  func.func @transform_5(%arg0: i32, %arg1: i32) -> (i32, i32) {
    %c0_i32 = arith.constant 0 : i32
    %c0_i32_0 = arith.constant 0 : i32
    %c0_i32_1 = arith.constant 0 : i32
    return %c0_i32, %c0_i32_0 : i32, i32
  }
  func.func @transform_6(%arg0: i32, %arg1: i32) -> (i32, i32) {
    %c0_i32 = arith.constant 0 : i32
    %c0_i32_0 = arith.constant 0 : i32
    %c0_i32_1 = arith.constant 0 : i32
    return %c0_i32, %c0_i32_0 : i32, i32
  }
  func.func @transform_7(%arg0: i32, %arg1: i32) -> (i32, i32) {
    %c0_i32 = arith.constant 0 : i32
    %c0_i32_0 = arith.constant 0 : i32
    %c0_i32_1 = arith.constant 0 : i32
    return %c0_i32, %c0_i32_0 : i32, i32
  }
  func.func @transform_8(%arg0: i32, %arg1: i32) -> (i32, i32) {
    %c0_i32 = arith.constant 0 : i32
    %c0_i32_0 = arith.constant 0 : i32
    %c0_i32_1 = arith.constant 0 : i32
    return %c0_i32, %c0_i32_0 : i32, i32
  }
  func.func @transform_9(%arg0: i32, %arg1: i32) -> (i32, i32) {
    %c0_i32 = arith.constant 0 : i32
    %c0_i32_0 = arith.constant 0 : i32
    %c0_i32_1 = arith.constant 0 : i32
    return %c0_i32, %c0_i32_0 : i32, i32
  }
  func.func @transform_10(%arg0: i32, %arg1: i32) -> (i32, i32) {
    %c0_i32 = arith.constant 0 : i32
    %c0_i32_0 = arith.constant 0 : i32
    %c0_i32_1 = arith.constant 0 : i32
    return %c0_i32, %c0_i32_0 : i32, i32
  }
  func.func @transform_11(%arg0: i32, %arg1: i32) -> (i32, i32) {
    %c0_i32 = arith.constant 0 : i32
    %c0_i32_0 = arith.constant 0 : i32
    %c0_i32_1 = arith.constant 0 : i32
    return %c0_i32, %c0_i32_0 : i32, i32
  }
  func.func @transform_12(%arg0: i32, %arg1: i32) -> (i32, i32) {
    %c0_i32 = arith.constant 0 : i32
    %c0_i32_0 = arith.constant 0 : i32
    %c0_i32_1 = arith.constant 0 : i32
    return %c0_i32, %c0_i32_0 : i32, i32
  }
  func.func @transform_13(%arg0: i32, %arg1: i32) -> (i32, i32) {
    %c0_i32 = arith.constant 0 : i32
    %c0_i32_0 = arith.constant 0 : i32
    %c0_i32_1 = arith.constant 0 : i32
    return %c0_i32, %c0_i32_0 : i32, i32
  }
  func.func @transform_14(%arg0: i32, %arg1: i32) -> (i32, i32, i32) {
    %c0_i32 = arith.constant 0 : i32
    %c0_i32_0 = arith.constant 0 : i32
    return %arg0, %arg1, %c0_i32 : i32, i32, i32
  }
}

</mosaic_0001>

<llo_original>
// kernel: tpu_custom_call.1
$region0: #{tpu_custom_call.1}
  #allocation0 [shape = 'u32[]', space=smem, size = 0x4, offset = 0x4, fixed_abs, tag = 'smem constant byte address 0x4 - core index']
  #allocation1 [shape = 'u32[144,128]{1,0:T(1,128)}', space=vmem, size = 0x12000, scoped, tag = 'internal scratch']
  %s0 = inlined_call_operand.vmem [shape: f32[2,8,32], index: 0, kind: input, shape index: {}]
  %s1 = inlined_call_operand.vmem [shape: f32[2,8,32], index: 1, kind: input, shape index: {}]
  %s2 = inlined_call_operand.vmem [shape: bf16[32,32], index: 2, kind: input, shape index: {}]
  %s3 = inlined_call_operand.vmem [shape: bf16[32,64], index: 3, kind: input, shape index: {}]
  %s4 = inlined_call_operand.vmem [shape: bf16[32,32], index: 4, kind: input, shape index: {}]
  %s5 = inlined_call_operand.vmem [shape: f32[1,32], index: 5, kind: input, shape index: {}]
  %s6 = inlined_call_operand.hbm [shape: bf16[32,128], index: 6, kind: input, shape index: {}]
  %s7 = inlined_call_operand.vmem [shape: f32[1,128], index: 7, kind: input, shape index: {}]
  %s8 = inlined_call_operand.vmem [shape: bf16[128,32], index: 8, kind: input, shape index: {}]
  %s9 = inlined_call_operand.vmem [shape: f32[1,32], index: 9, kind: input, shape index: {}]
  %s10 = inlined_call_operand.vmem [shape: f32[1,32], index: 10, kind: input, shape index: {}]
  %s11 = inlined_call_operand.vmem [shape: f32[1,32], index: 11, kind: input, shape index: {}]
  %s12 = inlined_call_operand.vmem [shape: f32[1,32], index: 12, kind: input, shape index: {}]
  %s13 = inlined_call_operand.vmem [shape: f32[1,32], index: 13, kind: input, shape index: {}]
  %s14 = inlined_call_operand.hbm [shape: f32[2,8,32], index: 14, kind: output, shape index: {}]
  %s15 = sld [smem:[#allocation0]]
  $region100: #{tpu_custom_call.1} parent=0
    _
  %s17 = ssub.s32 1, %s15
  %s18 = scalar_select 0, %s17, %s15
  $region1: #{tpu_custom_call.1} parent=0
    #allocation2 [shape = 'u8[8192]{0}', space=vmem, size = 0x2000, scoped, tag = 'input window, operand 6, single buffered']
    #allocation3 [shape = 's32[2]{0}', space=sflag, size = 0x8, scoped, tag = 'scoped memory for tpu_custom_call.1']
    #allocation4 [shape = 's32[2]{0}', space=sflag, size = 0x8, scoped, tag = 'scoped memory for tpu_custom_call.1']
    #allocation5 [shape = 'u8[8192]{0}', space=vmem, size = 0x2000, scoped, tag = 'output window, operand 0']
    %19 = vsyncpa [#allocation3], 0
    %20 = vsyncpa [#allocation4], 0
    %s21 = scalar_lea.sflag [#allocation4], 1
    %22 = vsyncpa %s21, 0
    loop: start=0, step=1, limit=4
    $region2: #{tpu_custom_call.1} parent=1 // loop_pre_header
      _
    $region3: #{tpu_custom_call.1} parent=1 // loop_header
      %s24 = sphi 0, %s28
      %p25 = scmp.ge.s32.totalorder %s24, 4
      %s31 = sphi 0, %s43
      %s32 = sphi 0, %s39
      %s33 = sphi 0, %s31
      %s34 = sphi 0, %s32
      %s35 = sphi 0, %s33
      %s36 = sphi 0, %s34
      %s48 = sphi 0, %s50
      %s51 = sphi 0, %s48
      %s52 = sphi 0, %s51
      %s68 = sphi 0, %s52
      %s74 = sphi 0, %s76
      %s77 = sphi 0, %s74
      %s78 = sphi 0, %s77
      %s94 = sphi 0, %s78
      %s98 = sphi 0, %s98
      %s100 = sphi 0, %s98
      %s101 = sphi 0, %s100
      %s115 = sphi 0, %s101
      %s119 = sphi 0, %s119
      %s121 = sphi 0, %s119
      %s122 = sphi 0, %s121
      %s136 = sphi 0, %s122
      %s140 = sphi 0, %s140
      %s142 = sphi 0, %s140
      %s143 = sphi 0, %s142
      %s157 = sphi 0, %s143
      %s161 = sphi 0, %s161
      %s163 = sphi 0, %s161
      %s164 = sphi 0, %s163
      %s178 = sphi 0, %s164
      %s182 = sphi 0, %s182
      %s184 = sphi 0, %s182
      %s185 = sphi 0, %s184
      %s199 = sphi 0, %s185
      %s203 = sphi 0, %s203
      %s205 = sphi 0, %s203
      %s206 = sphi 0, %s205
      %s220 = sphi 0, %s206
      %s224 = sphi 0, %s224
      %s226 = sphi 0, %s224
      %s227 = sphi 0, %s226
      %s241 = sphi 0, %s227
      %s245 = sphi 0, %s245
      %s247 = sphi 0, %s245
      %s248 = sphi 0, %s247
      %s262 = sphi 0, %s248
      %s266 = sphi 0, %s266
      %s268 = sphi 0, %s266
      %s269 = sphi 0, %s268
      %s283 = sphi 0, %s269
      %s287 = sphi 0, %s287
      %s289 = sphi 0, %s287
      %s290 = sphi 0, %s289
      %s304 = sphi 0, %s290
      %s308 = sphi 0, %s308
      %s310 = sphi 0, %s308
      %s311 = sphi 0, %s310
      %s325 = sphi 0, %s311
      %s329 = sphi 0, %s329
      %s331 = sphi 0, %s329
      %s332 = sphi 0, %s331
      %s346 = sphi 0, %s332
      %s354 = sphi 0, %s356
      %s357 = sphi 0, %s354
      %s358 = sphi 0, %s357
      %s374 = sphi 0, %s358
    $region4: #{tpu_custom_call.1} parent=1 // loop_header_branch
      %27 = sbr.rel (%p25) target = $region8
    $region5: #{tpu_custom_call.1} parent=1 // loop_body
      %s29 = ssub.s32 %s24, 1
      %s30 = ssub.s32 %s24, 2
      %s37 = sadd.s32 1, %s32
      %p38 = scmp.ge.s32.totalorder %s37, 1
      %s39 = scalar_select %p38, 0, %s37
      %s40 = sadd.s32 1, %s31
      %s41 = scalar_select %p38, %s40, %s31
      %p42 = scmp.ge.s32.totalorder %s41, 2
      %s43 = scalar_select %p42, 0, %s41
      %s44 = ssub.s32 %s31, %s43
      %s45 = ssub.s32 %s32, %s39
      %s46 = sor.u32 %s44, %s45
      %p47 = scmp.eq.s32.totalorder %s46, 0
      %s49 = sadd.s32 %s48, 1
      %s50 = scalar_select %p47, %s48, %s49
      %p53 = pneg %p47
      %p54 = scmp.eq.s32.totalorder %s24, 1
      %p55 = por %p53, %p54
      %p56 = scmp.ne.s32.totalorder %s48, %s51
      %p57 = scmp.eq.s32.totalorder %s24, 0
      %p58 = por %p56, %p57
      %p59 = scmp.ne.s32.totalorder %s48, %s51
      %p60 = scmp.eq.s32.totalorder %s29, 1
      %p61 = por %p59, %p60
      %p62 = scmp.ne.s32.totalorder %s51, %s52
      %p63 = scmp.eq.s32.totalorder %s29, 0
      %p64 = por %p62, %p63
      %p65 = scmp.ne.s32.totalorder %s51, %s52
      %p66 = scmp.eq.s32.totalorder %s30, 1
      %p67 = por %p65, %p66
      %p69 = scmp.ne.s32.totalorder %s52, %s68
      %p70 = scmp.eq.s32.totalorder %s30, 0
      %p71 = por %p69, %p70
      %s72 = ssub.s32 %s31, %s43
      %p73 = scmp.eq.s32.totalorder %s72, 0
      %s75 = sadd.s32 %s74, 1
      %s76 = scalar_select %p73, %s74, %s75
      %p79 = pneg %p73
      %p80 = scmp.eq.s32.totalorder %s24, 1
      %p81 = por %p79, %p80
      %p82 = scmp.ne.s32.totalorder %s74, %s77
      %p83 = scmp.eq.s32.totalorder %s24, 0
      %p84 = por %p82, %p83
      %p85 = scmp.ne.s32.totalorder %s74, %s77
      %p86 = scmp.eq.s32.totalorder %s29, 1
      %p87 = por %p85, %p86
      %p88 = scmp.ne.s32.totalorder %s77, %s78
      %p89 = scmp.eq.s32.totalorder %s29, 0
      %p90 = por %p88, %p89
      %p91 = scmp.ne.s32.totalorder %s77, %s78
      %p92 = scmp.eq.s32.totalorder %s30, 1
      %p93 = por %p91, %p92
      %p95 = scmp.ne.s32.totalorder %s78, %s94
      %p96 = scmp.eq.s32.totalorder %s30, 0
      %p97 = por %p95, %p96
      %s99 = sadd.s32 %s98, 1
      %p102 = scmp.eq.s32.totalorder %s24, 1
      %p103 = scmp.ne.s32.totalorder %s98, %s100
      %p104 = scmp.eq.s32.totalorder %s24, 0
      %p105 = por %p103, %p104
      %p106 = scmp.ne.s32.totalorder %s98, %s100
      %p107 = scmp.eq.s32.totalorder %s29, 1
      %p108 = por %p106, %p107
      %p109 = scmp.ne.s32.totalorder %s100, %s101
      %p110 = scmp.eq.s32.totalorder %s29, 0
      %p111 = por %p109, %p110
      %p112 = scmp.ne.s32.totalorder %s100, %s101
      %p113 = scmp.eq.s32.totalorder %s30, 1
      %p114 = por %p112, %p113
      %p116 = scmp.ne.s32.totalorder %s101, %s115
      %p117 = scmp.eq.s32.totalorder %s30, 0
      %p118 = por %p116, %p117
      %s120 = sadd.s32 %s119, 1
      %p123 = scmp.eq.s32.totalorder %s24, 1
      %p124 = scmp.ne.s32.totalorder %s119, %s121
      %p125 = scmp.eq.s32.totalorder %s24, 0
      %p126 = por %p124, %p125
      %p127 = scmp.ne.s32.totalorder %s119, %s121
      %p128 = scmp.eq.s32.totalorder %s29, 1
      %p129 = por %p127, %p128
      %p130 = scmp.ne.s32.totalorder %s121, %s122
      %p131 = scmp.eq.s32.totalorder %s29, 0
      %p132 = por %p130, %p131
      %p133 = scmp.ne.s32.totalorder %s121, %s122
      %p134 = scmp.eq.s32.totalorder %s30, 1
      %p135 = por %p133, %p134
      %p137 = scmp.ne.s32.totalorder %s122, %s136
      %p138 = scmp.eq.s32.totalorder %s30, 0
      %p139 = por %p137, %p138
      %s141 = sadd.s32 %s140, 1
      %p144 = scmp.eq.s32.totalorder %s24, 1
      %p145 = scmp.ne.s32.totalorder %s140, %s142
      %p146 = scmp.eq.s32.totalorder %s24, 0
      %p147 = por %p145, %p146
      %p148 = scmp.ne.s32.totalorder %s140, %s142
      %p149 = scmp.eq.s32.totalorder %s29, 1
      %p150 = por %p148, %p149
      %p151 = scmp.ne.s32.totalorder %s142, %s143
      %p152 = scmp.eq.s32.totalorder %s29, 0
      %p153 = por %p151, %p152
      %p154 = scmp.ne.s32.totalorder %s142, %s143
      %p155 = scmp.eq.s32.totalorder %s30, 1
      %p156 = por %p154, %p155
      %p158 = scmp.ne.s32.totalorder %s143, %s157
      %p159 = scmp.eq.s32.totalorder %s30, 0
      %p160 = por %p158, %p159
      %s162 = sadd.s32 %s161, 1
      %p165 = scmp.eq.s32.totalorder %s24, 1
      %p166 = scmp.ne.s32.totalorder %s161, %s163
      %p167 = scmp.eq.s32.totalorder %s24, 0
      %p168 = por %p166, %p167
      %p169 = scmp.ne.s32.totalorder %s161, %s163
      %p170 = scmp.eq.s32.totalorder %s29, 1
      %p171 = por %p169, %p170
      %p172 = scmp.ne.s32.totalorder %s163, %s164
      %p173 = scmp.eq.s32.totalorder %s29, 0
      %p174 = por %p172, %p173
      %p175 = scmp.ne.s32.totalorder %s163, %s164
      %p176 = scmp.eq.s32.totalorder %s30, 1
      %p177 = por %p175, %p176
      %p179 = scmp.ne.s32.totalorder %s164, %s178
      %p180 = scmp.eq.s32.totalorder %s30, 0
      %p181 = por %p179, %p180
      %s183 = sadd.s32 %s182, 1
      %p186 = scmp.eq.s32.totalorder %s24, 1
      %p187 = scmp.ne.s32.totalorder %s182, %s184
      %p188 = scmp.eq.s32.totalorder %s24, 0
      %p189 = por %p187, %p188
      %p190 = scmp.ne.s32.totalorder %s182, %s184
      %p191 = scmp.eq.s32.totalorder %s29, 1
      %p192 = por %p190, %p191
      %p193 = scmp.ne.s32.totalorder %s184, %s185
      %p194 = scmp.eq.s32.totalorder %s29, 0
      %p195 = por %p193, %p194
      %p196 = scmp.ne.s32.totalorder %s184, %s185
      %p197 = scmp.eq.s32.totalorder %s30, 1
      %p198 = por %p196, %p197
      %p200 = scmp.ne.s32.totalorder %s185, %s199
      %p201 = scmp.eq.s32.totalorder %s30, 0
      %p202 = por %p200, %p201
      %s204 = sadd.s32 %s203, 1
      %p207 = scmp.eq.s32.totalorder %s24, 1
      %p208 = scmp.ne.s32.totalorder %s203, %s205
      %p209 = scmp.eq.s32.totalorder %s24, 0
      %p210 = por %p208, %p209
      %p211 = scmp.ne.s32.totalorder %s203, %s205
      %p212 = scmp.eq.s32.totalorder %s29, 1
      %p213 = por %p211, %p212
      %p214 = scmp.ne.s32.totalorder %s205, %s206
      %p215 = scmp.eq.s32.totalorder %s29, 0
      %p216 = por %p214, %p215
      %p217 = scmp.ne.s32.totalorder %s205, %s206
      %p218 = scmp.eq.s32.totalorder %s30, 1
      %p219 = por %p217, %p218
      %p221 = scmp.ne.s32.totalorder %s206, %s220
      %p222 = scmp.eq.s32.totalorder %s30, 0
      %p223 = por %p221, %p222
      %s225 = sadd.s32 %s224, 1
      %p228 = scmp.eq.s32.totalorder %s24, 1
      %p229 = scmp.ne.s32.totalorder %s224, %s226
      %p230 = scmp.eq.s32.totalorder %s24, 0
      %p231 = por %p229, %p230
      %p232 = scmp.ne.s32.totalorder %s224, %s226
      %p233 = scmp.eq.s32.totalorder %s29, 1
      %p234 = por %p232, %p233
      %p235 = scmp.ne.s32.totalorder %s226, %s227
      %p236 = scmp.eq.s32.totalorder %s29, 0
      %p237 = por %p235, %p236
      %p238 = scmp.ne.s32.totalorder %s226, %s227
      %p239 = scmp.eq.s32.totalorder %s30, 1
      %p240 = por %p238, %p239
      %p242 = scmp.ne.s32.totalorder %s227, %s241
      %p243 = scmp.eq.s32.totalorder %s30, 0
      %p244 = por %p242, %p243
      %s246 = sadd.s32 %s245, 1
      %p249 = scmp.eq.s32.totalorder %s24, 1
      %p250 = scmp.ne.s32.totalorder %s245, %s247
      %p251 = scmp.eq.s32.totalorder %s24, 0
      %p252 = por %p250, %p251
      %p253 = scmp.ne.s32.totalorder %s245, %s247
      %p254 = scmp.eq.s32.totalorder %s29, 1
      %p255 = por %p253, %p254
      %p256 = scmp.ne.s32.totalorder %s247, %s248
      %p257 = scmp.eq.s32.totalorder %s29, 0
      %p258 = por %p256, %p257
      %p259 = scmp.ne.s32.totalorder %s247, %s248
      %p260 = scmp.eq.s32.totalorder %s30, 1
      %p261 = por %p259, %p260
      %p263 = scmp.ne.s32.totalorder %s248, %s262
      %p264 = scmp.eq.s32.totalorder %s30, 0
      %p265 = por %p263, %p264
      %s267 = sadd.s32 %s266, 1
      %p270 = scmp.eq.s32.totalorder %s24, 1
      %p271 = scmp.ne.s32.totalorder %s266, %s268
      %p272 = scmp.eq.s32.totalorder %s24, 0
      %p273 = por %p271, %p272
      %p274 = scmp.ne.s32.totalorder %s266, %s268
      %p275 = scmp.eq.s32.totalorder %s29, 1
      %p276 = por %p274, %p275
      %p277 = scmp.ne.s32.totalorder %s268, %s269
      %p278 = scmp.eq.s32.totalorder %s29, 0
      %p279 = por %p277, %p278
      %p280 = scmp.ne.s32.totalorder %s268, %s269
      %p281 = scmp.eq.s32.totalorder %s30, 1
      %p282 = por %p280, %p281
      %p284 = scmp.ne.s32.totalorder %s269, %s283
      %p285 = scmp.eq.s32.totalorder %s30, 0
      %p286 = por %p284, %p285
      %s288 = sadd.s32 %s287, 1
      %p291 = scmp.eq.s32.totalorder %s24, 1
      %p292 = scmp.ne.s32.totalorder %s287, %s289
      %p293 = scmp.eq.s32.totalorder %s24, 0
      %p294 = por %p292, %p293
      %p295 = scmp.ne.s32.totalorder %s287, %s289
      %p296 = scmp.eq.s32.totalorder %s29, 1
      %p297 = por %p295, %p296
      %p298 = scmp.ne.s32.totalorder %s289, %s290
      %p299 = scmp.eq.s32.totalorder %s29, 0
      %p300 = por %p298, %p299
      %p301 = scmp.ne.s32.totalorder %s289, %s290
      %p302 = scmp.eq.s32.totalorder %s30, 1
      %p303 = por %p301, %p302
      %p305 = scmp.ne.s32.totalorder %s290, %s304
      %p306 = scmp.eq.s32.totalorder %s30, 0
      %p307 = por %p305, %p306
      %s309 = sadd.s32 %s308, 1
      %p312 = scmp.eq.s32.totalorder %s24, 1
      %p313 = scmp.ne.s32.totalorder %s308, %s310
      %p314 = scmp.eq.s32.totalorder %s24, 0
      %p315 = por %p313, %p314
      %p316 = scmp.ne.s32.totalorder %s308, %s310
      %p317 = scmp.eq.s32.totalorder %s29, 1
      %p318 = por %p316, %p317
      %p319 = scmp.ne.s32.totalorder %s310, %s311
      %p320 = scmp.eq.s32.totalorder %s29, 0
      %p321 = por %p319, %p320
      %p322 = scmp.ne.s32.totalorder %s310, %s311
      %p323 = scmp.eq.s32.totalorder %s30, 1
      %p324 = por %p322, %p323
      %p326 = scmp.ne.s32.totalorder %s311, %s325
      %p327 = scmp.eq.s32.totalorder %s30, 0
      %p328 = por %p326, %p327
      %s330 = sadd.s32 %s329, 1
      %p333 = scmp.eq.s32.totalorder %s24, 1
      %p334 = scmp.ne.s32.totalorder %s329, %s331
      %p335 = scmp.eq.s32.totalorder %s24, 0
      %p336 = por %p334, %p335
      %p337 = scmp.ne.s32.totalorder %s329, %s331
      %p338 = scmp.eq.s32.totalorder %s29, 1
      %p339 = por %p337, %p338
      %p340 = scmp.ne.s32.totalorder %s331, %s332
      %p341 = scmp.eq.s32.totalorder %s29, 0
      %p342 = por %p340, %p341
      %p343 = scmp.ne.s32.totalorder %s331, %s332
      %p344 = scmp.eq.s32.totalorder %s30, 1
      %p345 = por %p343, %p344
      %p347 = scmp.ne.s32.totalorder %s332, %s346
      %p348 = scmp.eq.s32.totalorder %s30, 0
      %p349 = por %p347, %p348
      %s350 = ssub.s32 %s31, %s43
      %s351 = ssub.s32 %s32, %s39
      %s352 = sor.u32 %s350, %s351
      %p353 = scmp.eq.s32.totalorder %s352, 0
      %s355 = sadd.s32 %s354, 1
      %s356 = scalar_select %p353, %s354, %s355
      %p359 = pneg %p353
      %p360 = scmp.eq.s32.totalorder %s24, 1
      %p361 = por %p359, %p360
      %p362 = scmp.ne.s32.totalorder %s354, %s357
      %p363 = scmp.eq.s32.totalorder %s24, 0
      %p364 = por %p362, %p363
      %p365 = scmp.ne.s32.totalorder %s354, %s357
      %p366 = scmp.eq.s32.totalorder %s29, 1
      %p367 = por %p365, %p366
      %p368 = scmp.ne.s32.totalorder %s357, %s358
      %p369 = scmp.eq.s32.totalorder %s29, 0
      %p370 = por %p368, %p369
      %p371 = scmp.ne.s32.totalorder %s357, %s358
      %p372 = scmp.eq.s32.totalorder %s30, 1
      %p373 = por %p371, %p372
      %p375 = scmp.ne.s32.totalorder %s358, %s374
      %p376 = scmp.eq.s32.totalorder %s30, 0
      %p377 = por %p375, %p376
      %p378 = scmp.le.s32.totalorder 1, %s24
      %p379 = scmp.lt.s32.totalorder %s24, 3
      %p380 = pnand %p378, %p379
      %p381 = pneg %p380
      // Predicated region
      $region9: #{tpu_custom_call.1} parent=5 // pred_check
        _
      $region10: #{tpu_custom_call.1} parent=5 // pred_check_branch
        %383 = sbr.rel (%p380) target = $region12
      $region11: #{tpu_custom_call.1} parent=5 // pred_region
        %s384 = ssub.s32 %s24, 1
        // Predicated region
        $region13: #{tpu_custom_call.1} parent=11 // pred_check
          %p385 = pneg %p111
        $region14: #{tpu_custom_call.1} parent=11 // pred_check_branch
          %387 = sbr.rel (%p385) target = $region16
        $region15: #{tpu_custom_call.1} parent=11 // pred_region
          _
        $region16: #{tpu_custom_call.1} parent=11 // pred_fallthru
          _
        // Predicated region
        $region17: #{tpu_custom_call.1} parent=11 // pred_check
          %p388 = pneg %p132
        $region18: #{tpu_custom_call.1} parent=11 // pred_check_branch
          %390 = sbr.rel (%p388) target = $region20
        $region19: #{tpu_custom_call.1} parent=11 // pred_region
          _
        $region20: #{tpu_custom_call.1} parent=11 // pred_fallthru
          _
        // Predicated region
        $region21: #{tpu_custom_call.1} parent=11 // pred_check
          %p391 = pneg %p153
        $region22: #{tpu_custom_call.1} parent=11 // pred_check_branch
          %393 = sbr.rel (%p391) target = $region24
        $region23: #{tpu_custom_call.1} parent=11 // pred_region
          _
        $region24: #{tpu_custom_call.1} parent=11 // pred_fallthru
          _
        // Predicated region
        $region25: #{tpu_custom_call.1} parent=11 // pred_check
          %p394 = pneg %p174
        $region26: #{tpu_custom_call.1} parent=11 // pred_check_branch
          %396 = sbr.rel (%p394) target = $region28
        $region27: #{tpu_custom_call.1} parent=11 // pred_region
          _
        $region28: #{tpu_custom_call.1} parent=11 // pred_fallthru
          _
        // Predicated region
        $region29: #{tpu_custom_call.1} parent=11 // pred_check
          %p397 = pneg %p195
        $region30: #{tpu_custom_call.1} parent=11 // pred_check_branch
          %399 = sbr.rel (%p397) target = $region32
        $region31: #{tpu_custom_call.1} parent=11 // pred_region
          %s401 = ssub.s32 256, 256
          %402 = vsyncadd [#allocation3], %s401
          %s403 = sshll.u32 [#allocation2], 4
          %s404 = int_to_ptr.vmem [resolvable:$true] %s403
          %409 = dma.hbm_to_vmem [thread:$0]  %s6, 256, %s404, [#allocation3], 64, 64, 4
        $region32: #{tpu_custom_call.1} parent=11 // pred_fallthru
          _
        // Predicated region
        $region33: #{tpu_custom_call.1} parent=11 // pred_check
          %p410 = pneg %p216
        $region34: #{tpu_custom_call.1} parent=11 // pred_check_branch
          %412 = sbr.rel (%p410) target = $region36
        $region35: #{tpu_custom_call.1} parent=11 // pred_region
          _
        $region36: #{tpu_custom_call.1} parent=11 // pred_fallthru
          _
        // Predicated region
        $region37: #{tpu_custom_call.1} parent=11 // pred_check
          %p413 = pneg %p237
        $region38: #{tpu_custom_call.1} parent=11 // pred_check_branch
          %415 = sbr.rel (%p413) target = $region40
        $region39: #{tpu_custom_call.1} parent=11 // pred_region
          _
        $region40: #{tpu_custom_call.1} parent=11 // pred_fallthru
          _
        // Predicated region
        $region41: #{tpu_custom_call.1} parent=11 // pred_check
          %p416 = pneg %p258
        $region42: #{tpu_custom_call.1} parent=11 // pred_check_branch
          %418 = sbr.rel (%p416) target = $region44
        $region43: #{tpu_custom_call.1} parent=11 // pred_region
          _
        $region44: #{tpu_custom_call.1} parent=11 // pred_fallthru
          _
        // Predicated region
        $region45: #{tpu_custom_call.1} parent=11 // pred_check
          %p419 = pneg %p279
        $region46: #{tpu_custom_call.1} parent=11 // pred_check_branch
          %421 = sbr.rel (%p419) target = $region48
        $region47: #{tpu_custom_call.1} parent=11 // pred_region
          _
        $region48: #{tpu_custom_call.1} parent=11 // pred_fallthru
          _
        // Predicated region
        $region49: #{tpu_custom_call.1} parent=11 // pred_check
          %p422 = pneg %p300
        $region50: #{tpu_custom_call.1} parent=11 // pred_check_branch
          %424 = sbr.rel (%p422) target = $region52
        $region51: #{tpu_custom_call.1} parent=11 // pred_region
          _
        $region52: #{tpu_custom_call.1} parent=11 // pred_fallthru
          _
        // Predicated region
        $region53: #{tpu_custom_call.1} parent=11 // pred_check
          %p425 = pneg %p321
        $region54: #{tpu_custom_call.1} parent=11 // pred_check_branch
          %427 = sbr.rel (%p425) target = $region56
        $region55: #{tpu_custom_call.1} parent=11 // pred_region
          _
        $region56: #{tpu_custom_call.1} parent=11 // pred_fallthru
          _
        // Predicated region
        $region57: #{tpu_custom_call.1} parent=11 // pred_check
          %p428 = pneg %p342
        $region58: #{tpu_custom_call.1} parent=11 // pred_check_branch
          %430 = sbr.rel (%p428) target = $region60
        $region59: #{tpu_custom_call.1} parent=11 // pred_region
          _
        $region60: #{tpu_custom_call.1} parent=11 // pred_fallthru
          _
      $region12: #{tpu_custom_call.1} parent=5 // pred_fallthru
        _
      %p431 = scmp.lt.s32.totalorder %s24, 2
      // Predicated region
      $region61: #{tpu_custom_call.1} parent=5 // pred_check
        %p432 = pneg %p431
      $region62: #{tpu_custom_call.1} parent=5 // pred_check_branch
        %434 = sbr.rel (%p432) target = $region64
      $region63: #{tpu_custom_call.1} parent=5 // pred_region
        // Predicated region
        $region65: #{tpu_custom_call.1} parent=63 // pred_check
          %p435 = pneg %p58
        $region66: #{tpu_custom_call.1} parent=63 // pred_check_branch
          %437 = sbr.rel (%p435) target = $region68
        $region67: #{tpu_custom_call.1} parent=63 // pred_region
          %p438 = scmp.lt.s32.totalorder %s31, 1
          %s439 = scalar_select %p438, %s31, 1
          %p440 = scmp.lt.s32.totalorder %s32, 0
          %s441 = scalar_select %p440, %s32, 0
          %s442 = sadd.s32 %s441, %s439
          %s443 = smul.addr %s442, 8
          %s444 = scalar_lea.vmem %s0, %s443
        $region68: #{tpu_custom_call.1} parent=63 // pred_fallthru
          _
        // Predicated region
        $region69: #{tpu_custom_call.1} parent=63 // pred_check
          %p445 = pneg %p84
        $region70: #{tpu_custom_call.1} parent=63 // pred_check_branch
          %447 = sbr.rel (%p445) target = $region72
        $region71: #{tpu_custom_call.1} parent=63 // pred_region
          %p448 = scmp.lt.s32.totalorder %s31, 1
          %s449 = scalar_select %p448, %s31, 1
          %s450 = smul.addr %s449, 8
          %s451 = scalar_lea.vmem %s1, %s450
        $region72: #{tpu_custom_call.1} parent=63 // pred_fallthru
          _
      $region64: #{tpu_custom_call.1} parent=5 // pred_fallthru
        _
      %p452 = scmp.le.s32.totalorder 1, %s24
      %p453 = scmp.lt.s32.totalorder %s24, 3
      %p454 = pnand %p452, %p453
      %p455 = pneg %p454
      // Predicated region
      $region73: #{tpu_custom_call.1} parent=5 // pred_check
        _
      $region74: #{tpu_custom_call.1} parent=5 // pred_check_branch
        %457 = sbr.rel (%p454) target = $region76
      $region75: #{tpu_custom_call.1} parent=5 // pred_region
        %s458 = ssub.s32 %s24, 1
        // Predicated region
        $region77: #{tpu_custom_call.1} parent=75 // pred_check
          %p459 = pneg %p195
        $region78: #{tpu_custom_call.1} parent=75 // pred_check_branch
          %461 = sbr.rel (%p459) target = $region80
        $region79: #{tpu_custom_call.1} parent=75 // pred_region
          %462 = dma.done [#allocation3], 256
        $region80: #{tpu_custom_call.1} parent=75 // pred_fallthru
          _
        %p463 = scmp.lt.s32.totalorder %s33, 1
        %s464 = scalar_select %p463, %s33, 1
        %p465 = scmp.lt.s32.totalorder %s34, 0
        %s466 = scalar_select %p465, %s34, 0
        %s467 = sadd.s32 %s466, %s464
        %s468 = smul.addr %s467, 8
        %s469 = scalar_lea.vmem %s0, %s468
        %p470 = pneg %p64
        %p471 = pneg %p61
        %p472 = scmp.lt.s32.totalorder %s33, 1
        %s473 = scalar_select %p472, %s33, 1
        %s474 = smul.addr %s473, 8
        %s475 = scalar_lea.vmem %s1, %s474
        %p476 = pneg %p90
        %p477 = pneg %p87
        %p478 = pneg %p111
        %p479 = pneg %p108
        %p480 = pneg %p132
        %p481 = pneg %p129
        %p482 = pneg %p153
        %p483 = pneg %p150
        %p484 = pneg %p174
        %p485 = pneg %p171
        %p486 = pneg %p195
        %p487 = pneg %p192
        %p488 = pneg %p216
        %p489 = pneg %p213
        %p490 = pneg %p237
        %p491 = pneg %p234
        %p492 = pneg %p258
        %p493 = pneg %p255
        %p494 = pneg %p279
        %p495 = pneg %p276
        %p496 = pneg %p300
        %p497 = pneg %p297
        %p498 = pneg %p321
        %p499 = pneg %p318
        %p500 = pneg %p342
        %p501 = pneg %p339
        %p502 = pneg %p370
        %p503 = pneg %p367
        %s504 = sand.u32 %s357, 1
        %s505 = scalar_lea.sflag [#allocation4], %s504
        %s506 = sand.u32 %s357, 1
        %s507 = smul.addr %s506, 8
        %s508 = scalar_lea.vmem [#allocation5], %s507
        %p509 = scmp.lt.s32.totalorder %s33, 1
        %s510 = scalar_select %p509, %s33, 1
        %p511 = scmp.lt.s32.totalorder %s34, 0
        %s512 = scalar_select %p511, %s34, 0
        %s513 = sadd.s32 %s512, %s510
        %s514 = smul.addr %s513, 8
        %s515 = scalar_lea.vmem %s0, %s514
        %p516 = scmp.lt.s32.totalorder %s33, 1
        %s517 = scalar_select %p516, %s33, 1
        %s518 = smul.addr %s517, 8
        %s519 = scalar_lea.vmem %s1, %s518
        %v521 = vld [vmem:[%s515] sm:$0xff]
        %v522 = vld [vmem:[%s10] sm:$0x1]
        %v523 = vld [vmem:[%s11] sm:$0x1]
        %vm524 = vcmask 261120
        %v525 = vsel %vm524, %v521, 0.0
        %526 = vadd.xlane.f32.xlu0 %v525
        %v527 = vpop.xlane.xlu0 %526
        %v528 = vrcp.pop 32.0
        %v529 = vmul.f32 %v527, %v528
        %v530 = vsub.f32 %v521, %v529
        %v531 = vmul.f32 %v530, %v530
        %v532 = vsel %vm524, %v531, 0.0
        %533 = vadd.xlane.f32.xlu0 %v532
        %v534 = vpop.xlane.xlu0 %533
        %v535 = vmul.f32 %v534, %v528
        %v536 = vadd.f32 %v535, 1e-05
        %v537 = vrsqrt.pop %v536
        %v538 = vmul.f32 %v530, %v537
        %v540 = vlaneseq
        %v541 = vshrl.u32 %v540, 7
        %v542 = vsub.s32 0, %v541
        %v543 = vrot.slane %v522, %v542
        %v545 = vmul.f32 %v538, %v543
        %v547 = vlaneseq
        %v548 = vshrl.u32 %v547, 7
        %v549 = vsub.s32 0, %v548
        %v550 = vrot.slane %v523, %v549
        %v552 = vadd.f32 %v545, %v550
        %v553 = vpack.c.bf16 %v552, %v552
        %v554 = vld [vmem:[%s2] sm:$0xf]
        %v555 = vld [vmem:[%s2 + $0x4] sm:$0xf]
        %v556 = vld [vmem:[%s2 + $0x8] sm:$0xf]
        %v557 = vld [vmem:[%s2 + $0xc] sm:$0xf]
        %v562 = vunpack.c.l.b16 %v554
        %v563 = vunpack.c.l.b16 %v555
        %v564 = vunpack.c.l.b16 %v556
        %v565 = vunpack.c.l.b16 %v557
        %v566 = vpack.c.b16 %v563, %v562
        %v567 = vpack.c.b16 %v565, %v564
        %v571 = vsel %vm524, %v553, 0
        %573 = vmatprep.subr.bf16.mxu0 0
        %574 = vmatpush1.bf16.msra.mxu0 0
        %575 = vmatprep.subr.bf16.mxu0 0
        %576 = vmatpush1.bf16.msra.mxu0 0
        %577 = vmatprep.subr.bf16.mxu0 0
        %578 = vmatpush1.bf16.msra.mxu0 0
        %579 = vmatprep.subr.bf16.mxu0 0
        %580 = vmatpush1.bf16.msra.mxu0 0
        %581 = vmatprep.subr.bf16.mxu0 0
        %582 = vmatpush1.bf16.msra.mxu0 0
        %583 = vmatprep.subr.bf16.mxu0 0
        %584 = vmatpush1.bf16.msra.mxu0 0
        %585 = vmatprep.subr.bf16.mxu0 0
        %586 = vmatpush1.bf16.msra.mxu0 %v567
        %587 = vmatprep.subr.bf16.mxu0 0
        %588 = vmatpush1.bf16.msra.mxu0 %v566
        %589 = vmatprep.subr.bf16.mxu0 0
        %590 = vmatpush2.bf16.msra.mxu0 0
        %591 = vmatprep.subr.bf16.mxu0 0
        %592 = vmatpush2.bf16.msra.mxu0 0
        %593 = vmatprep.subr.bf16.mxu0 0
        %594 = vmatpush2.bf16.msra.mxu0 0
        %595 = vmatprep.subr.bf16.mxu0 0
        %596 = vmatpush2.bf16.msra.mxu0 0
        %597 = vmatprep.subr.bf16.mxu0 0
        %598 = vmatpush2.bf16.msra.mxu0 0
        %599 = vmatprep.subr.bf16.mxu0 0
        %600 = vmatpush2.bf16.msra.mxu0 0
        %601 = vmatprep.subr.bf16.mxu0 0
        %602 = vmatpush2.bf16.msra.mxu0 0
        %603 = vmatprep.subr.bf16.mxu0 0
        %604 = vmatpush2.bf16.msra.mxu0 0
        %605 = vmatprep.mubr.bf16.mxu0 0
        %606 = vmatmul.mubr.bf16.gmra.mxu0 %v571
        %v607 = vpop.f32.mrf.mxu0
        %v608 = vadd.f32 0.0, %v607
        %v609 = vpop.f32.mrf.mxu0
        %v610 = vpop.f32.mrf.mxu0
        %v611 = vpop.f32.mrf.mxu0
        %612 = vdwg.mxu0
        %614 = vrot.lane.b32.xlu0 %v608, 120
        %v615 = vpop.permute.xlu0 %614
        %617 = vrot.lane.b32.xlu0 %v608, 112
        %v618 = vpop.permute.xlu0 %617
        %620 = vrot.lane.b32.xlu0 %v608, 104
        %v621 = vpop.permute.xlu0 %620
        %v623 = vcombine.low %v608, %v618
        %v624 = vcombine.high %v608, %v618
        %v626 = vunpack.c.l.s4 1983009808
        %v627 = vunpack.c.0.s8 %v626
        %v628 = vlaneseq
        %v629 = vshrl.u32 %v628, 7
        %v630 = vsub.s32 %v627, %v629
        %v631 = vrot.slane %v623, %v630
        %v633 = vunpack.c.l.s4 1983009808
        %v634 = vunpack.c.0.s8 %v633
        %v635 = vlaneseq
        %v636 = vshrl.u32 %v635, 7
        %v637 = vsub.s32 %v634, %v636
        %v638 = vrot.slane %v624, %v637
        %v639 = vcombine.low %v615, %v621
        %v640 = vcombine.high %v615, %v621
        %v642 = vunpack.c.l.s4 1983009808
        %v643 = vunpack.c.0.s8 %v642
        %v644 = vlaneseq
        %v645 = vshrl.u32 %v644, 7
        %v646 = vsub.s32 %v643, %v645
        %v647 = vrot.slane %v639, %v646
        %v649 = vunpack.c.l.s4 1983009808
        %v650 = vunpack.c.0.s8 %v649
        %v651 = vlaneseq
        %v652 = vshrl.u32 %v651, 7
        %v653 = vsub.s32 %v650, %v652
        %v654 = vrot.slane %v640, %v653
        %v655 = vcombine.low %v631, %v647
        %v656 = vcombine.high %v631, %v647
        %v658 = vunpack.c.l.s4 1934713408
        %v659 = vunpack.c.0.s8 %v658
        %v660 = vlaneseq
        %v661 = vshrl.u32 %v660, 7
        %v662 = vsub.s32 %v659, %v661
        %v663 = vrot.slane %v655, %v662
        %v665 = vunpack.c.l.s4 1934713408
        %v666 = vunpack.c.0.s8 %v665
        %v667 = vlaneseq
        %v668 = vshrl.u32 %v667, 7
        %v669 = vsub.s32 %v666, %v668
        %v670 = vrot.slane %v656, %v669
        %v671 = vcombine.low %v638, %v654
        %v672 = vcombine.high %v638, %v654
        %v674 = vunpack.c.l.s4 1934713408
        %v675 = vunpack.c.0.s8 %v674
        %v676 = vlaneseq
        %v677 = vshrl.u32 %v676, 7
        %v678 = vsub.s32 %v675, %v677
        %v679 = vrot.slane %v671, %v678
        %v681 = vunpack.c.l.s4 1934713408
        %v682 = vunpack.c.0.s8 %v681
        %v683 = vlaneseq
        %v684 = vshrl.u32 %v683, 7
        %v685 = vsub.s32 %v682, %v684
        %v686 = vrot.slane %v672, %v685
        %v687 = vcombine.high %v663, 0.0
        %v688 = vcombine.high %v670, 0.0
        %v689 = vcombine.high %v679, 0.0
        %v690 = vcombine.high %v686, 0.0
        %v691 = vpack.c.bf16 %v663, %v663
        %v692 = vpack.c.bf16 %v687, %v687
        %v693 = vpack.c.bf16 %v670, %v670
        %v694 = vpack.c.bf16 %v688, %v688
        %v695 = vpack.c.bf16 %v679, %v679
        %v696 = vpack.c.bf16 %v689, %v689
        %v697 = vpack.c.bf16 %v686, %v686
        %v698 = vpack.c.bf16 %v690, %v690
        %s699 = smul.u32 %s34, 8
        %v700 = vlaneseq
        %v701 = vshrl.u32 %v700, 7
        %v702 = vstv %s699
        %v703 = vadd.s32 %v702, %v701
        %s704 = sadd.s32 %s34, 1
        // While loop
        $region81: #{tpu_custom_call.1} parent=75 // loop_pre_header
          _
        $region82: #{tpu_custom_call.1} parent=75 // loop_header
          %s706 = sphi 0, %s708
          %p707 = scmp.ge.s32.totalorder %s706, %s704
          %v711 = vphi -1e+30, %v1664
          %v712 = vphi -1e+30, %v1665
          %v713 = vphi -1e+30, %v1666
          %v714 = vphi -1e+30, %v1667
          %v715 = vphi 0.0, %v1708
          %v716 = vphi 0.0, %v1709
          %v717 = vphi 0.0, %v1710
          %v718 = vphi 0.0, %v1711
          %v719 = vphi 0.0, %v1966
          %v720 = vphi 0.0, %v1967
          %v721 = vphi 0.0, %v1968
          %v722 = vphi 0.0, %v1969
        $region83: #{tpu_custom_call.1} parent=75 // loop_header_branch
          %710 = sbr.rel (%p707) target = $region87
        $region84: #{tpu_custom_call.1} parent=75 // loop_body
          %s723 = smul.u32 %s706, 8
          %s724 = scalar_lea.vmem %s519, %s723
          %v725 = vld [vmem:[%s724] sm:$0xff]
          %v726 = vsel %vm524, %v725, 0.0
          %727 = vadd.xlane.f32.xlu0 %v726
          %v728 = vpop.xlane.xlu0 %727
          %v729 = vmul.f32 %v728, %v528
          %v730 = vsub.f32 %v725, %v729
          %v731 = vmul.f32 %v730, %v730
          %v732 = vsel %vm524, %v731, 0.0
          %733 = vadd.xlane.f32.xlu0 %v732
          %v734 = vpop.xlane.xlu0 %733
          %v735 = vmul.f32 %v734, %v528
          %v736 = vadd.f32 %v735, 1e-05
          %v737 = vrsqrt.pop %v736
          %v738 = vmul.f32 %v730, %v737
          %v739 = vmul.f32 %v738, %v543
          %v740 = vadd.f32 %v739, %v550
          %v741 = vpack.c.bf16 %v740, %v740
          %v742 = vld [vmem:[%s3] sm:$0xf]
          %v743 = vld [vmem:[%s3 + $0x4] sm:$0xf]
          %v744 = vld [vmem:[%s3 + $0x8] sm:$0xf]
          %v745 = vld [vmem:[%s3 + $0xc] sm:$0xf]
          %v750 = vunpack.c.l.b16 %v742
          %v751 = vunpack.c.l.b16 %v743
          %v752 = vunpack.c.l.b16 %v744
          %v753 = vunpack.c.l.b16 %v745
          %v754 = vpack.c.b16 %v751, %v750
          %v755 = vpack.c.b16 %v753, %v752
          %v759 = vsel %vm524, %v741, 0
          %761 = vmatprep.subr.bf16.mxu0 0
          %762 = vmatpush1.bf16.msra.mxu0 0
          %763 = vmatprep.subr.bf16.mxu0 0
          %764 = vmatpush1.bf16.msra.mxu0 0
          %765 = vmatprep.subr.bf16.mxu0 0
          %766 = vmatpush1.bf16.msra.mxu0 0
          %767 = vmatprep.subr.bf16.mxu0 0
          %768 = vmatpush1.bf16.msra.mxu0 0
          %769 = vmatprep.subr.bf16.mxu0 0
          %770 = vmatpush1.bf16.msra.mxu0 0
          %771 = vmatprep.subr.bf16.mxu0 0
          %772 = vmatpush1.bf16.msra.mxu0 0
          %773 = vmatprep.subr.bf16.mxu0 0
          %774 = vmatpush1.bf16.msra.mxu0 %v755
          %775 = vmatprep.subr.bf16.mxu0 0
          %776 = vmatpush1.bf16.msra.mxu0 %v754
          %777 = vmatprep.subr.bf16.mxu0 0
          %778 = vmatpush2.bf16.msra.mxu0 0
          %779 = vmatprep.subr.bf16.mxu0 0
          %780 = vmatpush2.bf16.msra.mxu0 0
          %781 = vmatprep.subr.bf16.mxu0 0
          %782 = vmatpush2.bf16.msra.mxu0 0
          %783 = vmatprep.subr.bf16.mxu0 0
          %784 = vmatpush2.bf16.msra.mxu0 0
          %785 = vmatprep.subr.bf16.mxu0 0
          %786 = vmatpush2.bf16.msra.mxu0 0
          %787 = vmatprep.subr.bf16.mxu0 0
          %788 = vmatpush2.bf16.msra.mxu0 0
          %789 = vmatprep.subr.bf16.mxu0 0
          %790 = vmatpush2.bf16.msra.mxu0 0
          %791 = vmatprep.subr.bf16.mxu0 0
          %792 = vmatpush2.bf16.msra.mxu0 0
          %793 = vmatprep.mubr.bf16.mxu0 0
          %794 = vmatmul.mubr.bf16.gmra.mxu0 %v759
          %v795 = vpop.f32.mrf.mxu0
          %v796 = vadd.f32 0.0, %v795
          %v797 = vpop.f32.mrf.mxu0
          %v798 = vpop.f32.mrf.mxu0
          %v799 = vpop.f32.mrf.mxu0
          %800 = vdwg.mxu0
          %802 = vrot.lane.b32.xlu0 %v796, 120
          %v803 = vpop.permute.xlu0 %802
          %805 = vrot.lane.b32.xlu0 %v796, 112
          %v806 = vpop.permute.xlu0 %805
          %808 = vrot.lane.b32.xlu0 %v796, 104
          %v809 = vpop.permute.xlu0 %808
          %v811 = vcombine.low %v796, %v806
          %v812 = vcombine.high %v796, %v806
          %v814 = vunpack.c.l.s4 1983009808
          %v815 = vunpack.c.0.s8 %v814
          %v816 = vlaneseq
          %v817 = vshrl.u32 %v816, 7
          %v818 = vsub.s32 %v815, %v817
          %v819 = vrot.slane %v811, %v818
          %v821 = vunpack.c.l.s4 1983009808
          %v822 = vunpack.c.0.s8 %v821
          %v823 = vlaneseq
          %v824 = vshrl.u32 %v823, 7
          %v825 = vsub.s32 %v822, %v824
          %v826 = vrot.slane %v812, %v825
          %v827 = vcombine.low %v803, %v809
          %v828 = vcombine.high %v803, %v809
          %v830 = vunpack.c.l.s4 1983009808
          %v831 = vunpack.c.0.s8 %v830
          %v832 = vlaneseq
          %v833 = vshrl.u32 %v832, 7
          %v834 = vsub.s32 %v831, %v833
          %v835 = vrot.slane %v827, %v834
          %v837 = vunpack.c.l.s4 1983009808
          %v838 = vunpack.c.0.s8 %v837
          %v839 = vlaneseq
          %v840 = vshrl.u32 %v839, 7
          %v841 = vsub.s32 %v838, %v840
          %v842 = vrot.slane %v828, %v841
          %v843 = vcombine.low %v819, %v835
          %v844 = vcombine.high %v819, %v835
          %v846 = vunpack.c.l.s4 1934713408
          %v847 = vunpack.c.0.s8 %v846
          %v848 = vlaneseq
          %v849 = vshrl.u32 %v848, 7
          %v850 = vsub.s32 %v847, %v849
          %v851 = vrot.slane %v843, %v850
          %v853 = vunpack.c.l.s4 1934713408
          %v854 = vunpack.c.0.s8 %v853
          %v855 = vlaneseq
          %v856 = vshrl.u32 %v855, 7
          %v857 = vsub.s32 %v854, %v856
          %v858 = vrot.slane %v844, %v857
          %v859 = vcombine.low %v826, %v842
          %v860 = vcombine.high %v826, %v842
          %v862 = vunpack.c.l.s4 1934713408
          %v863 = vunpack.c.0.s8 %v862
          %v864 = vlaneseq
          %v865 = vshrl.u32 %v864, 7
          %v866 = vsub.s32 %v863, %v865
          %v867 = vrot.slane %v859, %v866
          %v869 = vunpack.c.l.s4 1934713408
          %v870 = vunpack.c.0.s8 %v869
          %v871 = vlaneseq
          %v872 = vshrl.u32 %v871, 7
          %v873 = vsub.s32 %v870, %v872
          %v874 = vrot.slane %v860, %v873
          %v875 = vcombine.high %v851, 0.0
          %v876 = vcombine.high %v858, 0.0
          %v877 = vcombine.high %v867, 0.0
          %v878 = vcombine.high %v874, 0.0
          %v879 = vpack.c.bf16 %v851, %v851
          %v880 = vpack.c.bf16 %v875, %v875
          %v881 = vpack.c.bf16 %v858, %v858
          %v882 = vpack.c.bf16 %v876, %v876
          %v883 = vpack.c.bf16 %v867, %v867
          %v884 = vpack.c.bf16 %v877, %v877
          %v885 = vpack.c.bf16 %v874, %v874
          %v886 = vpack.c.bf16 %v878, %v878
          %887 = vrot.lane.b32.xlu0 %v796, 96
          %v888 = vpop.permute.xlu0 %887
          %889 = vrot.lane.b32.xlu0 %v803, 96
          %v890 = vpop.permute.xlu0 %889
          %891 = vrot.lane.b32.xlu0 %v806, 96
          %v892 = vpop.permute.xlu0 %891
          %893 = vrot.lane.b32.xlu0 %v809, 96
          %v894 = vpop.permute.xlu0 %893
          %v899 = vcombine.low %v888, %v892
          %v900 = vcombine.high %v888, %v892
          %v902 = vunpack.c.l.s4 1983009808
          %v903 = vunpack.c.0.s8 %v902
          %v904 = vlaneseq
          %v905 = vshrl.u32 %v904, 7
          %v906 = vsub.s32 %v903, %v905
          %v907 = vrot.slane %v899, %v906
          %v909 = vunpack.c.l.s4 1983009808
          %v910 = vunpack.c.0.s8 %v909
          %v911 = vlaneseq
          %v912 = vshrl.u32 %v911, 7
          %v913 = vsub.s32 %v910, %v912
          %v914 = vrot.slane %v900, %v913
          %v915 = vcombine.low %v890, %v894
          %v916 = vcombine.high %v890, %v894
          %v918 = vunpack.c.l.s4 1983009808
          %v919 = vunpack.c.0.s8 %v918
          %v920 = vlaneseq
          %v921 = vshrl.u32 %v920, 7
          %v922 = vsub.s32 %v919, %v921
          %v923 = vrot.slane %v915, %v922
          %v925 = vunpack.c.l.s4 1983009808
          %v926 = vunpack.c.0.s8 %v925
          %v927 = vlaneseq
          %v928 = vshrl.u32 %v927, 7
          %v929 = vsub.s32 %v926, %v928
          %v930 = vrot.slane %v916, %v929
          %v931 = vcombine.low %v907, %v923
          %v932 = vcombine.high %v907, %v923
          %v934 = vunpack.c.l.s4 1934713408
          %v935 = vunpack.c.0.s8 %v934
          %v936 = vlaneseq
          %v937 = vshrl.u32 %v936, 7
          %v938 = vsub.s32 %v935, %v937
          %v939 = vrot.slane %v931, %v938
          %v941 = vunpack.c.l.s4 1934713408
          %v942 = vunpack.c.0.s8 %v941
          %v943 = vlaneseq
          %v944 = vshrl.u32 %v943, 7
          %v945 = vsub.s32 %v942, %v944
          %v946 = vrot.slane %v932, %v945
          %v947 = vcombine.low %v914, %v930
          %v948 = vcombine.high %v914, %v930
          %v950 = vunpack.c.l.s4 1934713408
          %v951 = vunpack.c.0.s8 %v950
          %v952 = vlaneseq
          %v953 = vshrl.u32 %v952, 7
          %v954 = vsub.s32 %v951, %v953
          %v955 = vrot.slane %v947, %v954
          %v957 = vunpack.c.l.s4 1934713408
          %v958 = vunpack.c.0.s8 %v957
          %v959 = vlaneseq
          %v960 = vshrl.u32 %v959, 7
          %v961 = vsub.s32 %v958, %v960
          %v962 = vrot.slane %v948, %v961
          %v963 = vcombine.high %v939, 0.0
          %v964 = vcombine.high %v946, 0.0
          %v965 = vcombine.high %v955, 0.0
          %v966 = vcombine.high %v962, 0.0
          %v967 = vpack.c.bf16 %v939, %v939
          %v968 = vpack.c.bf16 %v963, %v963
          %v969 = vpack.c.bf16 %v946, %v946
          %v970 = vpack.c.bf16 %v964, %v964
          %v971 = vpack.c.bf16 %v955, %v955
          %v972 = vpack.c.bf16 %v965, %v965
          %v973 = vpack.c.bf16 %v962, %v962
          %v974 = vpack.c.bf16 %v966, %v966
          %v975 = vcombine.low %v691, %v695
          %v977 = vunpack.c.l.s4 1983009808
          %v978 = vunpack.c.0.s8 %v977
          %v979 = vlaneseq
          %v980 = vshrl.u32 %v979, 7
          %v981 = vsub.s32 %v978, %v980
          %v982 = vrot.slane %v975, %v981
          %v983 = vcombine.low %v693, %v697
          %v985 = vunpack.c.l.s4 1983009808
          %v986 = vunpack.c.0.s8 %v985
          %v987 = vlaneseq
          %v988 = vshrl.u32 %v987, 7
          %v989 = vsub.s32 %v986, %v988
          %v990 = vrot.slane %v983, %v989
          %v991 = vcombine.low %v982, %v990
          %v993 = vunpack.c.l.s4 1934713408
          %v994 = vunpack.c.0.s8 %v993
          %v995 = vlaneseq
          %v996 = vshrl.u32 %v995, 7
          %v997 = vsub.s32 %v994, %v996
          %v998 = vrot.slane %v991, %v997
          %v999 = vcombine.high %v998, 0
          %v1000 = vcombine.low %v692, %v696
          %v1002 = vunpack.c.l.s4 1983009808
          %v1003 = vunpack.c.0.s8 %v1002
          %v1004 = vlaneseq
          %v1005 = vshrl.u32 %v1004, 7
          %v1006 = vsub.s32 %v1003, %v1005
          %v1007 = vrot.slane %v1000, %v1006
          %v1008 = vcombine.low %v694, %v698
          %v1010 = vunpack.c.l.s4 1983009808
          %v1011 = vunpack.c.0.s8 %v1010
          %v1012 = vlaneseq
          %v1013 = vshrl.u32 %v1012, 7
          %v1014 = vsub.s32 %v1011, %v1013
          %v1015 = vrot.slane %v1008, %v1014
          %v1016 = vcombine.low %v1007, %v1015
          %v1018 = vunpack.c.l.s4 1934713408
          %v1019 = vunpack.c.0.s8 %v1018
          %v1020 = vlaneseq
          %v1021 = vshrl.u32 %v1020, 7
          %v1022 = vsub.s32 %v1019, %v1021
          %v1023 = vrot.slane %v1016, %v1022
          %v1024 = vcombine.high %v1023, 0
          %v1027 = vpack.i.b16 %v1023, %v998
          %v1028 = vshrl.u32 %v998, 16
          %v1029 = vshrl.u32 %v1023, 16
          %v1030 = vpack.i.b16 %v1029, %v1028
          %v1033 = vpack.i.b16 %v1024, %v999
          %v1034 = vshrl.u32 %v999, 16
          %v1035 = vshrl.u32 %v1024, 16
          %v1036 = vpack.i.b16 %v1035, %v1034
          %1037 = vxpose.xlu0.c.b16.start [1/8] %v879, 128
          %1038 = vxpose.xlu0.c.b16.cont [2/8] 0, 128
          %1039 = vxpose.xlu0.c.b16.cont [3/8] 0, 128
          %1040 = vxpose.xlu0.c.b16.cont [4/8] 0, 128
          %1041 = vxpose.xlu0.c.b16.cont [5/8] 0, 128
          %1042 = vxpose.xlu0.c.b16.cont [6/8] 0, 128
          %1043 = vxpose.xlu0.c.b16.cont [7/8] 0, 128
          %1044 = vxpose.xlu0.c.b16.end [8/8] 0, 128
          %v1045 = vpop.trf.xlu0
          %v1046 = vpop.trf.xlu0
          %v1047 = vpop.trf.xlu0
          %v1048 = vpop.trf.xlu0
          %v1049 = vpop.trf.xlu0
          %v1050 = vpop.trf.xlu0
          %v1051 = vpop.trf.xlu0
          %v1052 = vpop.trf.xlu0
          %1053 = vxpose.xlu0.c.b16.start [1/8] %v880, 128
          %1054 = vxpose.xlu0.c.b16.cont [2/8] 0, 128
          %1055 = vxpose.xlu0.c.b16.cont [3/8] 0, 128
          %1056 = vxpose.xlu0.c.b16.cont [4/8] 0, 128
          %1057 = vxpose.xlu0.c.b16.cont [5/8] 0, 128
          %1058 = vxpose.xlu0.c.b16.cont [6/8] 0, 128
          %1059 = vxpose.xlu0.c.b16.cont [7/8] 0, 128
          %1060 = vxpose.xlu0.c.b16.end [8/8] 0, 128
          %v1061 = vpop.trf.xlu0
          %v1062 = vpop.trf.xlu0
          %v1063 = vpop.trf.xlu0
          %v1064 = vpop.trf.xlu0
          %v1065 = vpop.trf.xlu0
          %v1066 = vpop.trf.xlu0
          %v1067 = vpop.trf.xlu0
          %v1068 = vpop.trf.xlu0
          %1069 = vxpose.xlu0.c.b16.start [1/8] %v881, 128
          %1070 = vxpose.xlu0.c.b16.cont [2/8] 0, 128
          %1071 = vxpose.xlu0.c.b16.cont [3/8] 0, 128
          %1072 = vxpose.xlu0.c.b16.cont [4/8] 0, 128
          %1073 = vxpose.xlu0.c.b16.cont [5/8] 0, 128
          %1074 = vxpose.xlu0.c.b16.cont [6/8] 0, 128
          %1075 = vxpose.xlu0.c.b16.cont [7/8] 0, 128
          %1076 = vxpose.xlu0.c.b16.end [8/8] 0, 128
          %v1077 = vpop.trf.xlu0
          %v1078 = vpop.trf.xlu0
          %v1079 = vpop.trf.xlu0
          %v1080 = vpop.trf.xlu0
          %v1081 = vpop.trf.xlu0
          %v1082 = vpop.trf.xlu0
          %v1083 = vpop.trf.xlu0
          %v1084 = vpop.trf.xlu0
          %1085 = vxpose.xlu0.c.b16.start [1/8] %v882, 128
          %1086 = vxpose.xlu0.c.b16.cont [2/8] 0, 128
          %1087 = vxpose.xlu0.c.b16.cont [3/8] 0, 128
          %1088 = vxpose.xlu0.c.b16.cont [4/8] 0, 128
          %1089 = vxpose.xlu0.c.b16.cont [5/8] 0, 128
          %1090 = vxpose.xlu0.c.b16.cont [6/8] 0, 128
          %1091 = vxpose.xlu0.c.b16.cont [7/8] 0, 128
          %1092 = vxpose.xlu0.c.b16.end [8/8] 0, 128
          %v1093 = vpop.trf.xlu0
          %v1094 = vpop.trf.xlu0
          %v1095 = vpop.trf.xlu0
          %v1096 = vpop.trf.xlu0
          %v1097 = vpop.trf.xlu0
          %v1098 = vpop.trf.xlu0
          %v1099 = vpop.trf.xlu0
          %v1100 = vpop.trf.xlu0
          %1101 = vxpose.xlu0.c.b16.start [1/8] %v883, 128
          %1102 = vxpose.xlu0.c.b16.cont [2/8] 0, 128
          %1103 = vxpose.xlu0.c.b16.cont [3/8] 0, 128
          %1104 = vxpose.xlu0.c.b16.cont [4/8] 0, 128
          %1105 = vxpose.xlu0.c.b16.cont [5/8] 0, 128
          %1106 = vxpose.xlu0.c.b16.cont [6/8] 0, 128
          %1107 = vxpose.xlu0.c.b16.cont [7/8] 0, 128
          %1108 = vxpose.xlu0.c.b16.end [8/8] 0, 128
          %v1109 = vpop.trf.xlu0
          %v1110 = vpop.trf.xlu0
          %v1111 = vpop.trf.xlu0
          %v1112 = vpop.trf.xlu0
          %v1113 = vpop.trf.xlu0
          %v1114 = vpop.trf.xlu0
          %v1115 = vpop.trf.xlu0
          %v1116 = vpop.trf.xlu0
          %1117 = vxpose.xlu0.c.b16.start [1/8] %v884, 128
          %1118 = vxpose.xlu0.c.b16.cont [2/8] 0, 128
          %1119 = vxpose.xlu0.c.b16.cont [3/8] 0, 128
          %1120 = vxpose.xlu0.c.b16.cont [4/8] 0, 128
          %1121 = vxpose.xlu0.c.b16.cont [5/8] 0, 128
          %1122 = vxpose.xlu0.c.b16.cont [6/8] 0, 128
          %1123 = vxpose.xlu0.c.b16.cont [7/8] 0, 128
          %1124 = vxpose.xlu0.c.b16.end [8/8] 0, 128
          %v1125 = vpop.trf.xlu0
          %v1126 = vpop.trf.xlu0
          %v1127 = vpop.trf.xlu0
          %v1128 = vpop.trf.xlu0
          %v1129 = vpop.trf.xlu0
          %v1130 = vpop.trf.xlu0
          %v1131 = vpop.trf.xlu0
          %v1132 = vpop.trf.xlu0
          %1133 = vxpose.xlu0.c.b16.start [1/8] %v885, 128
          %1134 = vxpose.xlu0.c.b16.cont [2/8] 0, 128
          %1135 = vxpose.xlu0.c.b16.cont [3/8] 0, 128
          %1136 = vxpose.xlu0.c.b16.cont [4/8] 0, 128
          %1137 = vxpose.xlu0.c.b16.cont [5/8] 0, 128
          %1138 = vxpose.xlu0.c.b16.cont [6/8] 0, 128
          %1139 = vxpose.xlu0.c.b16.cont [7/8] 0, 128
          %1140 = vxpose.xlu0.c.b16.end [8/8] 0, 128
          %v1141 = vpop.trf.xlu0
          %v1142 = vpop.trf.xlu0
          %v1143 = vpop.trf.xlu0
          %v1144 = vpop.trf.xlu0
          %v1145 = vpop.trf.xlu0
          %v1146 = vpop.trf.xlu0
          %v1147 = vpop.trf.xlu0
          %v1148 = vpop.trf.xlu0
          %1149 = vxpose.xlu0.c.b16.start [1/8] %v886, 128
          %1150 = vxpose.xlu0.c.b16.cont [2/8] 0, 128
          %1151 = vxpose.xlu0.c.b16.cont [3/8] 0, 128
          %1152 = vxpose.xlu0.c.b16.cont [4/8] 0, 128
          %1153 = vxpose.xlu0.c.b16.cont [5/8] 0, 128
          %1154 = vxpose.xlu0.c.b16.cont [6/8] 0, 128
          %1155 = vxpose.xlu0.c.b16.cont [7/8] 0, 128
          %1156 = vxpose.xlu0.c.b16.end [8/8] 0, 128
          %v1157 = vpop.trf.xlu0
          %v1158 = vpop.trf.xlu0
          %v1159 = vpop.trf.xlu0
          %v1160 = vpop.trf.xlu0
          %v1161 = vpop.trf.xlu0
          %v1162 = vpop.trf.xlu0
          %v1163 = vpop.trf.xlu0
          %v1164 = vpop.trf.xlu0
          %v1165 = vcombine.low %v1045, %v1109
          %v1167 = vunpack.c.l.s4 1983009808
          %v1168 = vunpack.c.0.s8 %v1167
          %v1169 = vlaneseq
          %v1170 = vshrl.u32 %v1169, 7
          %v1171 = vsub.s32 %v1168, %v1170
          %v1172 = vrot.slane %v1165, %v1171
          %v1173 = vcombine.low %v1077, %v1141
          %v1175 = vunpack.c.l.s4 1983009808
          %v1176 = vunpack.c.0.s8 %v1175
          %v1177 = vlaneseq
          %v1178 = vshrl.u32 %v1177, 7
          %v1179 = vsub.s32 %v1176, %v1178
          %v1180 = vrot.slane %v1173, %v1179
          %v1181 = vcombine.low %v1172, %v1180
          %v1182 = vcombine.high %v1172, %v1180
          %v1184 = vunpack.c.l.s4 1934713408
          %v1185 = vunpack.c.0.s8 %v1184
          %v1186 = vlaneseq
          %v1187 = vshrl.u32 %v1186, 7
          %v1188 = vsub.s32 %v1185, %v1187
          %v1189 = vrot.slane %v1181, %v1188
          %v1191 = vunpack.c.l.s4 1934713408
          %v1192 = vunpack.c.0.s8 %v1191
          %v1193 = vlaneseq
          %v1194 = vshrl.u32 %v1193, 7
          %v1195 = vsub.s32 %v1192, %v1194
          %v1196 = vrot.slane %v1182, %v1195
          %v1197 = vcombine.high %v1189, 0
          %v1198 = vcombine.high %v1196, 0
          %v1199 = vcombine.low %v1061, %v1125
          %v1201 = vunpack.c.l.s4 1983009808
          %v1202 = vunpack.c.0.s8 %v1201
          %v1203 = vlaneseq
          %v1204 = vshrl.u32 %v1203, 7
          %v1205 = vsub.s32 %v1202, %v1204
          %v1206 = vrot.slane %v1199, %v1205
          %v1207 = vcombine.low %v1093, %v1157
          %v1209 = vunpack.c.l.s4 1983009808
          %v1210 = vunpack.c.0.s8 %v1209
          %v1211 = vlaneseq
          %v1212 = vshrl.u32 %v1211, 7
          %v1213 = vsub.s32 %v1210, %v1212
          %v1214 = vrot.slane %v1207, %v1213
          %v1215 = vcombine.low %v1206, %v1214
          %v1216 = vcombine.high %v1206, %v1214
          %v1218 = vunpack.c.l.s4 1934713408
          %v1219 = vunpack.c.0.s8 %v1218
          %v1220 = vlaneseq
          %v1221 = vshrl.u32 %v1220, 7
          %v1222 = vsub.s32 %v1219, %v1221
          %v1223 = vrot.slane %v1215, %v1222
          %v1225 = vunpack.c.l.s4 1934713408
          %v1226 = vunpack.c.0.s8 %v1225
          %v1227 = vlaneseq
          %v1228 = vshrl.u32 %v1227, 7
          %v1229 = vsub.s32 %v1226, %v1228
          %v1230 = vrot.slane %v1216, %v1229
          %v1231 = vcombine.high %v1223, 0
          %v1232 = vcombine.high %v1230, 0
          %v1235 = vpack.i.b16 %v1223, %v1189
          %v1237 = vshrl.u32 %v1189, 16
          %v1238 = vshrl.u32 %v1223, 16
          %v1239 = vpack.i.b16 %v1238, %v1237
          %v1243 = vpack.i.b16 %v1231, %v1197
          %v1245 = vshrl.u32 %v1197, 16
          %v1246 = vshrl.u32 %v1231, 16
          %v1247 = vpack.i.b16 %v1246, %v1245
          %v1251 = vpack.i.b16 %v1230, %v1196
          %v1253 = vshrl.u32 %v1196, 16
          %v1254 = vshrl.u32 %v1230, 16
          %v1255 = vpack.i.b16 %v1254, %v1253
          %v1259 = vpack.i.b16 %v1232, %v1198
          %v1261 = vshrl.u32 %v1198, 16
          %v1262 = vshrl.u32 %v1232, 16
          %v1263 = vpack.i.b16 %v1262, %v1261
          %1265 = vxpose.xlu0.c.b16.start [1/8] %v1235, 128
          %1266 = vxpose.xlu0.c.b16.cont [2/8] 0, 128
          %1267 = vxpose.xlu0.c.b16.cont [3/8] 0, 128
          %1268 = vxpose.xlu0.c.b16.cont [4/8] 0, 128
          %1269 = vxpose.xlu0.c.b16.cont [5/8] 0, 128
          %1270 = vxpose.xlu0.c.b16.cont [6/8] 0, 128
          %1271 = vxpose.xlu0.c.b16.cont [7/8] 0, 128
          %1272 = vxpose.xlu0.c.b16.end [8/8] 0, 128
          %v1273 = vpop.trf.xlu0
          %v1274 = vpop.trf.xlu0
          %v1275 = vpop.trf.xlu0
          %v1276 = vpop.trf.xlu0
          %v1277 = vpop.trf.xlu0
          %v1278 = vpop.trf.xlu0
          %v1279 = vpop.trf.xlu0
          %v1280 = vpop.trf.xlu0
          %1281 = vxpose.xlu0.c.b16.start [1/8] %v1239, 128
          %1282 = vxpose.xlu0.c.b16.cont [2/8] 0, 128
          %1283 = vxpose.xlu0.c.b16.cont [3/8] 0, 128
          %1284 = vxpose.xlu0.c.b16.cont [4/8] 0, 128
          %1285 = vxpose.xlu0.c.b16.cont [5/8] 0, 128
          %1286 = vxpose.xlu0.c.b16.cont [6/8] 0, 128
          %1287 = vxpose.xlu0.c.b16.cont [7/8] 0, 128
          %1288 = vxpose.xlu0.c.b16.end [8/8] 0, 128
          %v1289 = vpop.trf.xlu0
          %v1290 = vpop.trf.xlu0
          %v1291 = vpop.trf.xlu0
          %v1292 = vpop.trf.xlu0
          %v1293 = vpop.trf.xlu0
          %v1294 = vpop.trf.xlu0
          %v1295 = vpop.trf.xlu0
          %v1296 = vpop.trf.xlu0
          %1297 = vxpose.xlu0.c.b16.start [1/8] %v1243, 128
          %1298 = vxpose.xlu0.c.b16.cont [2/8] 0, 128
          %1299 = vxpose.xlu0.c.b16.cont [3/8] 0, 128
          %1300 = vxpose.xlu0.c.b16.cont [4/8] 0, 128
          %1301 = vxpose.xlu0.c.b16.cont [5/8] 0, 128
          %1302 = vxpose.xlu0.c.b16.cont [6/8] 0, 128
          %1303 = vxpose.xlu0.c.b16.cont [7/8] 0, 128
          %1304 = vxpose.xlu0.c.b16.end [8/8] 0, 128
          %v1305 = vpop.trf.xlu0
          %v1306 = vpop.trf.xlu0
          %v1307 = vpop.trf.xlu0
          %v1308 = vpop.trf.xlu0
          %v1309 = vpop.trf.xlu0
          %v1310 = vpop.trf.xlu0
          %v1311 = vpop.trf.xlu0
          %v1312 = vpop.trf.xlu0
          %1313 = vxpose.xlu0.c.b16.start [1/8] %v1247, 128
          %1314 = vxpose.xlu0.c.b16.cont [2/8] 0, 128
          %1315 = vxpose.xlu0.c.b16.cont [3/8] 0, 128
          %1316 = vxpose.xlu0.c.b16.cont [4/8] 0, 128
          %1317 = vxpose.xlu0.c.b16.cont [5/8] 0, 128
          %1318 = vxpose.xlu0.c.b16.cont [6/8] 0, 128
          %1319 = vxpose.xlu0.c.b16.cont [7/8] 0, 128
          %1320 = vxpose.xlu0.c.b16.end [8/8] 0, 128
          %v1321 = vpop.trf.xlu0
          %v1322 = vpop.trf.xlu0
          %v1323 = vpop.trf.xlu0
          %v1324 = vpop.trf.xlu0
          %v1325 = vpop.trf.xlu0
          %v1326 = vpop.trf.xlu0
          %v1327 = vpop.trf.xlu0
          %v1328 = vpop.trf.xlu0
          %1329 = vxpose.xlu0.c.b16.start [1/8] %v1251, 128
          %1330 = vxpose.xlu0.c.b16.cont [2/8] 0, 128
          %1331 = vxpose.xlu0.c.b16.cont [3/8] 0, 128
          %1332 = vxpose.xlu0.c.b16.cont [4/8] 0, 128
          %1333 = vxpose.xlu0.c.b16.cont [5/8] 0, 128
          %1334 = vxpose.xlu0.c.b16.cont [6/8] 0, 128
          %1335 = vxpose.xlu0.c.b16.cont [7/8] 0, 128
          %1336 = vxpose.xlu0.c.b16.end [8/8] 0, 128
          %v1337 = vpop.trf.xlu0
          %v1338 = vpop.trf.xlu0
          %v1339 = vpop.trf.xlu0
          %v1340 = vpop.trf.xlu0
          %v1341 = vpop.trf.xlu0
          %v1342 = vpop.trf.xlu0
          %v1343 = vpop.trf.xlu0
          %v1344 = vpop.trf.xlu0
          %1345 = vxpose.xlu0.c.b16.start [1/8] %v1255, 128
          %1346 = vxpose.xlu0.c.b16.cont [2/8] 0, 128
          %1347 = vxpose.xlu0.c.b16.cont [3/8] 0, 128
          %1348 = vxpose.xlu0.c.b16.cont [4/8] 0, 128
          %1349 = vxpose.xlu0.c.b16.cont [5/8] 0, 128
          %1350 = vxpose.xlu0.c.b16.cont [6/8] 0, 128
          %1351 = vxpose.xlu0.c.b16.cont [7/8] 0, 128
          %1352 = vxpose.xlu0.c.b16.end [8/8] 0, 128
          %v1353 = vpop.trf.xlu0
          %v1354 = vpop.trf.xlu0
          %v1355 = vpop.trf.xlu0
          %v1356 = vpop.trf.xlu0
          %v1357 = vpop.trf.xlu0
          %v1358 = vpop.trf.xlu0
          %v1359 = vpop.trf.xlu0
          %v1360 = vpop.trf.xlu0
          %1361 = vxpose.xlu0.c.b16.start [1/8] %v1259, 128
          %1362 = vxpose.xlu0.c.b16.cont [2/8] 0, 128
          %1363 = vxpose.xlu0.c.b16.cont [3/8] 0, 128
          %1364 = vxpose.xlu0.c.b16.cont [4/8] 0, 128
          %1365 = vxpose.xlu0.c.b16.cont [5/8] 0, 128
          %1366 = vxpose.xlu0.c.b16.cont [6/8] 0, 128
          %1367 = vxpose.xlu0.c.b16.cont [7/8] 0, 128
          %1368 = vxpose.xlu0.c.b16.end [8/8] 0, 128
          %v1369 = vpop.trf.xlu0
          %v1370 = vpop.trf.xlu0
          %v1371 = vpop.trf.xlu0
          %v1372 = vpop.trf.xlu0
          %v1373 = vpop.trf.xlu0
          %v1374 = vpop.trf.xlu0
          %v1375 = vpop.trf.xlu0
          %v1376 = vpop.trf.xlu0
          %1377 = vxpose.xlu0.c.b16.start [1/8] %v1263, 128
          %1378 = vxpose.xlu0.c.b16.cont [2/8] 0, 128
          %1379 = vxpose.xlu0.c.b16.cont [3/8] 0, 128
          %1380 = vxpose.xlu0.c.b16.cont [4/8] 0, 128
          %1381 = vxpose.xlu0.c.b16.cont [5/8] 0, 128
          %1382 = vxpose.xlu0.c.b16.cont [6/8] 0, 128
          %1383 = vxpose.xlu0.c.b16.cont [7/8] 0, 128
          %1384 = vxpose.xlu0.c.b16.end [8/8] 0, 128
          %v1385 = vpop.trf.xlu0
          %v1386 = vpop.trf.xlu0
          %v1387 = vpop.trf.xlu0
          %v1388 = vpop.trf.xlu0
          %v1389 = vpop.trf.xlu0
          %v1390 = vpop.trf.xlu0
          %v1391 = vpop.trf.xlu0
          %v1392 = vpop.trf.xlu0
          %v1393 = vcombine.low %v1273, %v1337
          %v1395 = vunpack.c.l.s4 1983009808
          %v1396 = vunpack.c.0.s8 %v1395
          %v1397 = vlaneseq
          %v1398 = vshrl.u32 %v1397, 7
          %v1399 = vsub.s32 %v1396, %v1398
          %v1400 = vrot.slane %v1393, %v1399
          %v1401 = vcombine.low %v1305, %v1369
          %v1403 = vunpack.c.l.s4 1983009808
          %v1404 = vunpack.c.0.s8 %v1403
          %v1405 = vlaneseq
          %v1406 = vshrl.u32 %v1405, 7
          %v1407 = vsub.s32 %v1404, %v1406
          %v1408 = vrot.slane %v1401, %v1407
          %v1409 = vcombine.low %v1400, %v1408
          %v1411 = vunpack.c.l.s4 1934713408
          %v1412 = vunpack.c.0.s8 %v1411
          %v1413 = vlaneseq
          %v1414 = vshrl.u32 %v1413, 7
          %v1415 = vsub.s32 %v1412, %v1414
          %v1416 = vrot.slane %v1409, %v1415
          %v1417 = vcombine.high %v1416, 0
          %v1418 = vcombine.low %v1289, %v1353
          %v1420 = vunpack.c.l.s4 1983009808
          %v1421 = vunpack.c.0.s8 %v1420
          %v1422 = vlaneseq
          %v1423 = vshrl.u32 %v1422, 7
          %v1424 = vsub.s32 %v1421, %v1423
          %v1425 = vrot.slane %v1418, %v1424
          %v1426 = vcombine.low %v1321, %v1385
          %v1428 = vunpack.c.l.s4 1983009808
          %v1429 = vunpack.c.0.s8 %v1428
          %v1430 = vlaneseq
          %v1431 = vshrl.u32 %v1430, 7
          %v1432 = vsub.s32 %v1429, %v1431
          %v1433 = vrot.slane %v1426, %v1432
          %v1434 = vcombine.low %v1425, %v1433
          %v1436 = vunpack.c.l.s4 1934713408
          %v1437 = vunpack.c.0.s8 %v1436
          %v1438 = vlaneseq
          %v1439 = vshrl.u32 %v1438, 7
          %v1440 = vsub.s32 %v1437, %v1439
          %v1441 = vrot.slane %v1434, %v1440
          %v1442 = vcombine.high %v1441, 0
          %v1445 = vpack.i.b16 %v1441, %v1416
          %v1446 = vshrl.u32 %v1416, 16
          %v1447 = vshrl.u32 %v1441, 16
          %v1448 = vpack.i.b16 %v1447, %v1446
          %v1451 = vpack.i.b16 %v1442, %v1417
          %v1452 = vshrl.u32 %v1417, 16
          %v1453 = vshrl.u32 %v1442, 16
          %v1454 = vpack.i.b16 %v1453, %v1452
          %vm1455 = vcmask 64512
          %v1457 = vsel %vm1455, %v1027, 0
          %vm1459 = vcmask 1043456
          %v1461 = vsel %vm1459, %v1445, 0
          %1463 = vmatprep.subr.bf16.mxu0 0
          %1464 = vmatpush1.bf16.msra.mxu0 0
          %1465 = vmatprep.subr.bf16.mxu0 0
          %1466 = vmatpush1.bf16.msra.mxu0 0
          %1467 = vmatprep.subr.bf16.mxu0 0
          %1468 = vmatpush1.bf16.msra.mxu0 0
          %1469 = vmatprep.subr.bf16.mxu0 0
          %1470 = vmatpush1.bf16.msra.mxu0 0
          %1471 = vmatprep.subr.bf16.mxu0 0
          %1472 = vmatpush1.bf16.msra.mxu0 0
          %1473 = vmatprep.subr.bf16.mxu0 0
          %1474 = vmatpush1.bf16.msra.mxu0 0
          %1475 = vmatprep.subr.bf16.mxu0 0
          %1476 = vmatpush1.bf16.msra.mxu0 0
          %1477 = vmatprep.subr.bf16.mxu0 0
          %1478 = vmatpush1.bf16.msra.mxu0 %v1461
          %1479 = vmatprep.subr.bf16.mxu0 0
          %1480 = vmatpush2.bf16.msra.mxu0 0
          %1481 = vmatprep.subr.bf16.mxu0 0
          %1482 = vmatpush2.bf16.msra.mxu0 0
          %1483 = vmatprep.subr.bf16.mxu0 0
          %1484 = vmatpush2.bf16.msra.mxu0 0
          %1485 = vmatprep.subr.bf16.mxu0 0
          %1486 = vmatpush2.bf16.msra.mxu0 0
          %1487 = vmatprep.subr.bf16.mxu0 0
          %1488 = vmatpush2.bf16.msra.mxu0 0
          %1489 = vmatprep.subr.bf16.mxu0 0
          %1490 = vmatpush2.bf16.msra.mxu0 0
          %1491 = vmatprep.subr.bf16.mxu0 0
          %1492 = vmatpush2.bf16.msra.mxu0 0
          %1493 = vmatprep.subr.bf16.mxu0 0
          %1494 = vmatpush2.bf16.msra.mxu0 0
          %1495 = vmatprep.mubr.bf16.mxu0 0
          %1496 = vmatmul.mubr.bf16.gmra.mxu0 %v1457
          %v1497 = vpop.f32.mrf.mxu0
          %v1498 = vadd.f32 0.0, %v1497
          %v1499 = vpop.f32.mrf.mxu0
          %v1500 = vpop.f32.mrf.mxu0
          %v1501 = vpop.f32.mrf.mxu0
          %1502 = vdwg.mxu0
          %v1504 = vsel %vm1455, %v1030, 0
          %v1507 = vsel %vm1459, %v1448, 0
          %1509 = vmatprep.subr.bf16.mxu0 0
          %1510 = vmatpush1.bf16.msra.mxu0 0
          %1511 = vmatprep.subr.bf16.mxu0 0
          %1512 = vmatpush1.bf16.msra.mxu0 0
          %1513 = vmatprep.subr.bf16.mxu0 0
          %1514 = vmatpush1.bf16.msra.mxu0 0
          %1515 = vmatprep.subr.bf16.mxu0 0
          %1516 = vmatpush1.bf16.msra.mxu0 0
          %1517 = vmatprep.subr.bf16.mxu0 0
          %1518 = vmatpush1.bf16.msra.mxu0 0
          %1519 = vmatprep.subr.bf16.mxu0 0
          %1520 = vmatpush1.bf16.msra.mxu0 0
          %1521 = vmatprep.subr.bf16.mxu0 0
          %1522 = vmatpush1.bf16.msra.mxu0 0
          %1523 = vmatprep.subr.bf16.mxu0 0
          %1524 = vmatpush1.bf16.msra.mxu0 %v1507
          %1525 = vmatprep.subr.bf16.mxu0 0
          %1526 = vmatpush2.bf16.msra.mxu0 0
          %1527 = vmatprep.subr.bf16.mxu0 0
          %1528 = vmatpush2.bf16.msra.mxu0 0
          %1529 = vmatprep.subr.bf16.mxu0 0
          %1530 = vmatpush2.bf16.msra.mxu0 0
          %1531 = vmatprep.subr.bf16.mxu0 0
          %1532 = vmatpush2.bf16.msra.mxu0 0
          %1533 = vmatprep.subr.bf16.mxu0 0
          %1534 = vmatpush2.bf16.msra.mxu0 0
          %1535 = vmatprep.subr.bf16.mxu0 0
          %1536 = vmatpush2.bf16.msra.mxu0 0
          %1537 = vmatprep.subr.bf16.mxu0 0
          %1538 = vmatpush2.bf16.msra.mxu0 0
          %1539 = vmatprep.subr.bf16.mxu0 0
          %1540 = vmatpush2.bf16.msra.mxu0 0
          %1541 = vmatprep.mubr.bf16.mxu0 0
          %1542 = vmatmul.mubr.bf16.gmra.mxu0 %v1504
          %v1543 = vpop.f32.mrf.mxu0
          %v1544 = vadd.f32 0.0, %v1543
          %v1545 = vpop.f32.mrf.mxu0
          %v1546 = vpop.f32.mrf.mxu0
          %v1547 = vpop.f32.mrf.mxu0
          %1548 = vdwg.mxu0
          %v1550 = vsel %vm1455, %v1033, 0
          %v1553 = vsel %vm1459, %v1451, 0
          %1555 = vmatprep.subr.bf16.mxu0 0
          %1556 = vmatpush1.bf16.msra.mxu0 0
          %1557 = vmatprep.subr.bf16.mxu0 0
          %1558 = vmatpush1.bf16.msra.mxu0 0
          %1559 = vmatprep.subr.bf16.mxu0 0
          %1560 = vmatpush1.bf16.msra.mxu0 0
          %1561 = vmatprep.subr.bf16.mxu0 0
          %1562 = vmatpush1.bf16.msra.mxu0 0
          %1563 = vmatprep.subr.bf16.mxu0 0
          %1564 = vmatpush1.bf16.msra.mxu0 0
          %1565 = vmatprep.subr.bf16.mxu0 0
          %1566 = vmatpush1.bf16.msra.mxu0 0
          %1567 = vmatprep.subr.bf16.mxu0 0
          %1568 = vmatpush1.bf16.msra.mxu0 0
          %1569 = vmatprep.subr.bf16.mxu0 0
          %1570 = vmatpush1.bf16.msra.mxu0 %v1553
          %1571 = vmatprep.subr.bf16.mxu0 0
          %1572 = vmatpush2.bf16.msra.mxu0 0
          %1573 = vmatprep.subr.bf16.mxu0 0
          %1574 = vmatpush2.bf16.msra.mxu0 0
          %1575 = vmatprep.subr.bf16.mxu0 0
          %1576 = vmatpush2.bf16.msra.mxu0 0
          %1577 = vmatprep.subr.bf16.mxu0 0
          %1578 = vmatpush2.bf16.msra.mxu0 0
          %1579 = vmatprep.subr.bf16.mxu0 0
          %1580 = vmatpush2.bf16.msra.mxu0 0
          %1581 = vmatprep.subr.bf16.mxu0 0
          %1582 = vmatpush2.bf16.msra.mxu0 0
          %1583 = vmatprep.subr.bf16.mxu0 0
          %1584 = vmatpush2.bf16.msra.mxu0 0
          %1585 = vmatprep.subr.bf16.mxu0 0
          %1586 = vmatpush2.bf16.msra.mxu0 0
          %1587 = vmatprep.mubr.bf16.mxu0 0
          %1588 = vmatmul.mubr.bf16.gmra.mxu0 %v1550
          %v1589 = vpop.f32.mrf.mxu0
          %v1590 = vadd.f32 0.0, %v1589
          %v1591 = vpop.f32.mrf.mxu0
          %v1592 = vpop.f32.mrf.mxu0
          %v1593 = vpop.f32.mrf.mxu0
          %1594 = vdwg.mxu0
          %v1596 = vsel %vm1455, %v1036, 0
          %v1599 = vsel %vm1459, %v1454, 0
          %1601 = vmatprep.subr.bf16.mxu0 0
          %1602 = vmatpush1.bf16.msra.mxu0 0
          %1603 = vmatprep.subr.bf16.mxu0 0
          %1604 = vmatpush1.bf16.msra.mxu0 0
          %1605 = vmatprep.subr.bf16.mxu0 0
          %1606 = vmatpush1.bf16.msra.mxu0 0
          %1607 = vmatprep.subr.bf16.mxu0 0
          %1608 = vmatpush1.bf16.msra.mxu0 0
          %1609 = vmatprep.subr.bf16.mxu0 0
          %1610 = vmatpush1.bf16.msra.mxu0 0
          %1611 = vmatprep.subr.bf16.mxu0 0
          %1612 = vmatpush1.bf16.msra.mxu0 0
          %1613 = vmatprep.subr.bf16.mxu0 0
          %1614 = vmatpush1.bf16.msra.mxu0 0
          %1615 = vmatprep.subr.bf16.mxu0 0
          %1616 = vmatpush1.bf16.msra.mxu0 %v1599
          %1617 = vmatprep.subr.bf16.mxu0 0
          %1618 = vmatpush2.bf16.msra.mxu0 0
          %1619 = vmatprep.subr.bf16.mxu0 0
          %1620 = vmatpush2.bf16.msra.mxu0 0
          %1621 = vmatprep.subr.bf16.mxu0 0
          %1622 = vmatpush2.bf16.msra.mxu0 0
          %1623 = vmatprep.subr.bf16.mxu0 0
          %1624 = vmatpush2.bf16.msra.mxu0 0
          %1625 = vmatprep.subr.bf16.mxu0 0
          %1626 = vmatpush2.bf16.msra.mxu0 0
          %1627 = vmatprep.subr.bf16.mxu0 0
          %1628 = vmatpush2.bf16.msra.mxu0 0
          %1629 = vmatprep.subr.bf16.mxu0 0
          %1630 = vmatpush2.bf16.msra.mxu0 0
          %1631 = vmatprep.subr.bf16.mxu0 0
          %1632 = vmatpush2.bf16.msra.mxu0 0
          %1633 = vmatprep.mubr.bf16.mxu0 0
          %1634 = vmatmul.mubr.bf16.gmra.mxu0 %v1596
          %v1635 = vpop.f32.mrf.mxu0
          %v1636 = vadd.f32 0.0, %v1635
          %v1637 = vpop.f32.mrf.mxu0
          %v1638 = vpop.f32.mrf.mxu0
          %v1639 = vpop.f32.mrf.mxu0
          %1640 = vdwg.mxu0
          %v1641 = vlaneseq
          %v1642 = vand.u32 %v1641, 127
          %v1643 = vstv %s723
          %v1644 = vadd.s32 %v1643, %v1642
          %vm1645 = vcmp.le.s32.totalorder %v1644, %v703
          %v1646 = vsel %vm1645, 1, 0
          %vm1647 = vcmp.eq.s32.totalorder %v1646, 1
          %v1648 = vsel %vm1647, %v1498, -1e+30
          %v1649 = vsel %vm1647, %v1544, -1e+30
          %v1650 = vsel %vm1647, %v1590, -1e+30
          %v1651 = vsel %vm1647, %v1636, -1e+30
          %v1652 = vsel %vm1455, %v1648, -inf
          %1653 = vmax.xlane.f32.xlu0 %v1652
          %v1654 = vpop.xlane.xlu0 %1653
          %v1655 = vsel %vm1455, %v1649, -inf
          %1656 = vmax.xlane.f32.xlu0 %v1655
          %v1657 = vpop.xlane.xlu0 %1656
          %v1658 = vsel %vm1455, %v1650, -inf
          %1659 = vmax.xlane.f32.xlu0 %v1658
          %v1660 = vpop.xlane.xlu0 %1659
          %v1661 = vsel %vm1455, %v1651, -inf
          %1662 = vmax.xlane.f32.xlu0 %v1661
          %v1663 = vpop.xlane.xlu0 %1662
          %v1664 = vmax.f32 %v711, %v1654
          %v1665 = vmax.f32 %v712, %v1657
          %v1666 = vmax.f32 %v713, %v1660
          %v1667 = vmax.f32 %v714, %v1663
          %v1668 = vsub.f32 %v711, %v1664
          %v1669 = vsub.f32 %v712, %v1665
          %v1670 = vsub.f32 %v713, %v1666
          %v1671 = vsub.f32 %v714, %v1667
          %v1672 = vmul.f32 %v1668, 1.442695
          %v1673 = vpow.pop %v1672
          %v1674 = vmul.f32 %v1669, 1.442695
          %v1675 = vpow.pop %v1674
          %v1676 = vmul.f32 %v1670, 1.442695
          %v1677 = vpow.pop %v1676
          %v1678 = vmul.f32 %v1671, 1.442695
          %v1679 = vpow.pop %v1678
          %v1680 = vsub.f32 %v1648, %v1664
          %v1681 = vsub.f32 %v1649, %v1665
          %v1682 = vsub.f32 %v1650, %v1666
          %v1683 = vsub.f32 %v1651, %v1667
          %v1684 = vmul.f32 %v1680, 1.442695
          %v1685 = vpow.pop %v1684
          %v1686 = vmul.f32 %v1681, 1.442695
          %v1687 = vpow.pop %v1686
          %v1688 = vmul.f32 %v1682, 1.442695
          %v1689 = vpow.pop %v1688
          %v1690 = vmul.f32 %v1683, 1.442695
          %v1691 = vpow.pop %v1690
          %v1692 = vmul.f32 %v1673, %v715
          %v1693 = vmul.f32 %v1675, %v716
          %v1694 = vmul.f32 %v1677, %v717
          %v1695 = vmul.f32 %v1679, %v718
          %v1696 = vsel %vm1455, %v1685, 0.0
          %1697 = vadd.xlane.f32.xlu0 %v1696
          %v1698 = vpop.xlane.xlu0 %1697
          %v1699 = vsel %vm1455, %v1687, 0.0
          %1700 = vadd.xlane.f32.xlu0 %v1699
          %v1701 = vpop.xlane.xlu0 %1700
          %v1702 = vsel %vm1455, %v1689, 0.0
          %1703 = vadd.xlane.f32.xlu0 %v1702
          %v1704 = vpop.xlane.xlu0 %1703
          %v1705 = vsel %vm1455, %v1691, 0.0
          %1706 = vadd.xlane.f32.xlu0 %v1705
          %v1707 = vpop.xlane.xlu0 %1706
          %v1708 = vadd.f32 %v1692, %v1698
          %v1709 = vadd.f32 %v1693, %v1701
          %v1710 = vadd.f32 %v1694, %v1704
          %v1711 = vadd.f32 %v1695, %v1707
          %v1712 = vpack.c.bf16 %v1685, %v1685
          %v1713 = vpack.c.bf16 %v1687, %v1687
          %v1714 = vpack.c.bf16 %v1689, %v1689
          %v1715 = vpack.c.bf16 %v1691, %v1691
          %v1716 = vcombine.low %v967, %v971
          %v1718 = vunpack.c.l.s4 1983009808
          %v1719 = vunpack.c.0.s8 %v1718
          %v1720 = vlaneseq
          %v1721 = vshrl.u32 %v1720, 7
          %v1722 = vsub.s32 %v1719, %v1721
          %v1723 = vrot.slane %v1716, %v1722
          %v1724 = vcombine.low %v969, %v973
          %v1726 = vunpack.c.l.s4 1983009808
          %v1727 = vunpack.c.0.s8 %v1726
          %v1728 = vlaneseq
          %v1729 = vshrl.u32 %v1728, 7
          %v1730 = vsub.s32 %v1727, %v1729
          %v1731 = vrot.slane %v1724, %v1730
          %v1732 = vcombine.low %v1723, %v1731
          %v1734 = vunpack.c.l.s4 1934713408
          %v1735 = vunpack.c.0.s8 %v1734
          %v1736 = vlaneseq
          %v1737 = vshrl.u32 %v1736, 7
          %v1738 = vsub.s32 %v1735, %v1737
          %v1739 = vrot.slane %v1732, %v1738
          %v1740 = vcombine.high %v1739, 0
          %v1741 = vcombine.low %v968, %v972
          %v1743 = vunpack.c.l.s4 1983009808
          %v1744 = vunpack.c.0.s8 %v1743
          %v1745 = vlaneseq
          %v1746 = vshrl.u32 %v1745, 7
          %v1747 = vsub.s32 %v1744, %v1746
          %v1748 = vrot.slane %v1741, %v1747
          %v1749 = vcombine.low %v970, %v974
          %v1751 = vunpack.c.l.s4 1983009808
          %v1752 = vunpack.c.0.s8 %v1751
          %v1753 = vlaneseq
          %v1754 = vshrl.u32 %v1753, 7
          %v1755 = vsub.s32 %v1752, %v1754
          %v1756 = vrot.slane %v1749, %v1755
          %v1757 = vcombine.low %v1748, %v1756
          %v1759 = vunpack.c.l.s4 1934713408
          %v1760 = vunpack.c.0.s8 %v1759
          %v1761 = vlaneseq
          %v1762 = vshrl.u32 %v1761, 7
          %v1763 = vsub.s32 %v1760, %v1762
          %v1764 = vrot.slane %v1757, %v1763
          %v1765 = vcombine.high %v1764, 0
          %v1768 = vpack.i.b16 %v1764, %v1739
          %v1769 = vshrl.u32 %v1739, 16
          %v1770 = vshrl.u32 %v1764, 16
          %v1771 = vpack.i.b16 %v1770, %v1769
          %v1774 = vpack.i.b16 %v1765, %v1740
          %v1775 = vshrl.u32 %v1740, 16
          %v1776 = vshrl.u32 %v1765, 16
          %v1777 = vpack.i.b16 %v1776, %v1775
          %v1779 = vsel %vm1455, %v1712, 0
          %v1782 = vsel %vm1459, %v1768, 0
          %1784 = vmatprep.subr.bf16.mxu0 0
          %1785 = vmatpush1.bf16.msra.mxu0 0
          %1786 = vmatprep.subr.bf16.mxu0 0
          %1787 = vmatpush1.bf16.msra.mxu0 0
          %1788 = vmatprep.subr.bf16.mxu0 0
          %1789 = vmatpush1.bf16.msra.mxu0 0
          %1790 = vmatprep.subr.bf16.mxu0 0
          %1791 = vmatpush1.bf16.msra.mxu0 0
          %1792 = vmatprep.subr.bf16.mxu0 0
          %1793 = vmatpush1.bf16.msra.mxu0 0
          %1794 = vmatprep.subr.bf16.mxu0 0
          %1795 = vmatpush1.bf16.msra.mxu0 0
          %1796 = vmatprep.subr.bf16.mxu0 0
          %1797 = vmatpush1.bf16.msra.mxu0 0
          %1798 = vmatprep.subr.bf16.mxu0 0
          %1799 = vmatpush1.bf16.msra.mxu0 %v1782
          %1800 = vmatprep.subr.bf16.mxu0 0
          %1801 = vmatpush2.bf16.msra.mxu0 0
          %1802 = vmatprep.subr.bf16.mxu0 0
          %1803 = vmatpush2.bf16.msra.mxu0 0
          %1804 = vmatprep.subr.bf16.mxu0 0
          %1805 = vmatpush2.bf16.msra.mxu0 0
          %1806 = vmatprep.subr.bf16.mxu0 0
          %1807 = vmatpush2.bf16.msra.mxu0 0
          %1808 = vmatprep.subr.bf16.mxu0 0
          %1809 = vmatpush2.bf16.msra.mxu0 0
          %1810 = vmatprep.subr.bf16.mxu0 0
          %1811 = vmatpush2.bf16.msra.mxu0 0
          %1812 = vmatprep.subr.bf16.mxu0 0
          %1813 = vmatpush2.bf16.msra.mxu0 0
          %1814 = vmatprep.subr.bf16.mxu0 0
          %1815 = vmatpush2.bf16.msra.mxu0 0
          %1816 = vmatprep.mubr.bf16.mxu0 0
          %1817 = vmatmul.mubr.bf16.gmra.mxu0 %v1779
          %v1818 = vpop.f32.mrf.mxu0
          %v1819 = vadd.f32 0.0, %v1818
          %v1820 = vpop.f32.mrf.mxu0
          %v1821 = vpop.f32.mrf.mxu0
          %v1822 = vpop.f32.mrf.mxu0
          %1823 = vdwg.mxu0
          %v1825 = vsel %vm1455, %v1713, 0
          %v1828 = vsel %vm1459, %v1771, 0
          %1830 = vmatprep.subr.bf16.mxu0 0
          %1831 = vmatpush1.bf16.msra.mxu0 0
          %1832 = vmatprep.subr.bf16.mxu0 0
          %1833 = vmatpush1.bf16.msra.mxu0 0
          %1834 = vmatprep.subr.bf16.mxu0 0
          %1835 = vmatpush1.bf16.msra.mxu0 0
          %1836 = vmatprep.subr.bf16.mxu0 0
          %1837 = vmatpush1.bf16.msra.mxu0 0
          %1838 = vmatprep.subr.bf16.mxu0 0
          %1839 = vmatpush1.bf16.msra.mxu0 0
          %1840 = vmatprep.subr.bf16.mxu0 0
          %1841 = vmatpush1.bf16.msra.mxu0 0
          %1842 = vmatprep.subr.bf16.mxu0 0
          %1843 = vmatpush1.bf16.msra.mxu0 0
          %1844 = vmatprep.subr.bf16.mxu0 0
          %1845 = vmatpush1.bf16.msra.mxu0 %v1828
          %1846 = vmatprep.subr.bf16.mxu0 0
          %1847 = vmatpush2.bf16.msra.mxu0 0
          %1848 = vmatprep.subr.bf16.mxu0 0
          %1849 = vmatpush2.bf16.msra.mxu0 0
          %1850 = vmatprep.subr.bf16.mxu0 0
          %1851 = vmatpush2.bf16.msra.mxu0 0
          %1852 = vmatprep.subr.bf16.mxu0 0
          %1853 = vmatpush2.bf16.msra.mxu0 0
          %1854 = vmatprep.subr.bf16.mxu0 0
          %1855 = vmatpush2.bf16.msra.mxu0 0
          %1856 = vmatprep.subr.bf16.mxu0 0
          %1857 = vmatpush2.bf16.msra.mxu0 0
          %1858 = vmatprep.subr.bf16.mxu0 0
          %1859 = vmatpush2.bf16.msra.mxu0 0
          %1860 = vmatprep.subr.bf16.mxu0 0
          %1861 = vmatpush2.bf16.msra.mxu0 0
          %1862 = vmatprep.mubr.bf16.mxu0 0
          %1863 = vmatmul.mubr.bf16.gmra.mxu0 %v1825
          %v1864 = vpop.f32.mrf.mxu0
          %v1865 = vadd.f32 0.0, %v1864
          %v1866 = vpop.f32.mrf.mxu0
          %v1867 = vpop.f32.mrf.mxu0
          %v1868 = vpop.f32.mrf.mxu0
          %1869 = vdwg.mxu0
          %v1871 = vsel %vm1455, %v1714, 0
          %v1874 = vsel %vm1459, %v1774, 0
          %1876 = vmatprep.subr.bf16.mxu0 0
          %1877 = vmatpush1.bf16.msra.mxu0 0
          %1878 = vmatprep.subr.bf16.mxu0 0
          %1879 = vmatpush1.bf16.msra.mxu0 0
          %1880 = vmatprep.subr.bf16.mxu0 0
          %1881 = vmatpush1.bf16.msra.mxu0 0
          %1882 = vmatprep.subr.bf16.mxu0 0
          %1883 = vmatpush1.bf16.msra.mxu0 0
          %1884 = vmatprep.subr.bf16.mxu0 0
          %1885 = vmatpush1.bf16.msra.mxu0 0
          %1886 = vmatprep.subr.bf16.mxu0 0
          %1887 = vmatpush1.bf16.msra.mxu0 0
          %1888 = vmatprep.subr.bf16.mxu0 0
          %1889 = vmatpush1.bf16.msra.mxu0 0
          %1890 = vmatprep.subr.bf16.mxu0 0
          %1891 = vmatpush1.bf16.msra.mxu0 %v1874
          %1892 = vmatprep.subr.bf16.mxu0 0
          %1893 = vmatpush2.bf16.msra.mxu0 0
          %1894 = vmatprep.subr.bf16.mxu0 0
          %1895 = vmatpush2.bf16.msra.mxu0 0
          %1896 = vmatprep.subr.bf16.mxu0 0
          %1897 = vmatpush2.bf16.msra.mxu0 0
          %1898 = vmatprep.subr.bf16.mxu0 0
          %1899 = vmatpush2.bf16.msra.mxu0 0
          %1900 = vmatprep.subr.bf16.mxu0 0
          %1901 = vmatpush2.bf16.msra.mxu0 0
          %1902 = vmatprep.subr.bf16.mxu0 0
          %1903 = vmatpush2.bf16.msra.mxu0 0
          %1904 = vmatprep.subr.bf16.mxu0 0
          %1905 = vmatpush2.bf16.msra.mxu0 0
          %1906 = vmatprep.subr.bf16.mxu0 0
          %1907 = vmatpush2.bf16.msra.mxu0 0
          %1908 = vmatprep.mubr.bf16.mxu0 0
          %1909 = vmatmul.mubr.bf16.gmra.mxu0 %v1871
          %v1910 = vpop.f32.mrf.mxu0
          %v1911 = vadd.f32 0.0, %v1910
          %v1912 = vpop.f32.mrf.mxu0
          %v1913 = vpop.f32.mrf.mxu0
          %v1914 = vpop.f32.mrf.mxu0
          %1915 = vdwg.mxu0
          %v1917 = vsel %vm1455, %v1715, 0
          %v1920 = vsel %vm1459, %v1777, 0
          %1922 = vmatprep.subr.bf16.mxu0 0
          %1923 = vmatpush1.bf16.msra.mxu0 0
          %1924 = vmatprep.subr.bf16.mxu0 0
          %1925 = vmatpush1.bf16.msra.mxu0 0
          %1926 = vmatprep.subr.bf16.mxu0 0
          %1927 = vmatpush1.bf16.msra.mxu0 0
          %1928 = vmatprep.subr.bf16.mxu0 0
          %1929 = vmatpush1.bf16.msra.mxu0 0
          %1930 = vmatprep.subr.bf16.mxu0 0
          %1931 = vmatpush1.bf16.msra.mxu0 0
          %1932 = vmatprep.subr.bf16.mxu0 0
          %1933 = vmatpush1.bf16.msra.mxu0 0
          %1934 = vmatprep.subr.bf16.mxu0 0
          %1935 = vmatpush1.bf16.msra.mxu0 0
          %1936 = vmatprep.subr.bf16.mxu0 0
          %1937 = vmatpush1.bf16.msra.mxu0 %v1920
          %1938 = vmatprep.subr.bf16.mxu0 0
          %1939 = vmatpush2.bf16.msra.mxu0 0
          %1940 = vmatprep.subr.bf16.mxu0 0
          %1941 = vmatpush2.bf16.msra.mxu0 0
          %1942 = vmatprep.subr.bf16.mxu0 0
          %1943 = vmatpush2.bf16.msra.mxu0 0
          %1944 = vmatprep.subr.bf16.mxu0 0
          %1945 = vmatpush2.bf16.msra.mxu0 0
          %1946 = vmatprep.subr.bf16.mxu0 0
          %1947 = vmatpush2.bf16.msra.mxu0 0
          %1948 = vmatprep.subr.bf16.mxu0 0
          %1949 = vmatpush2.bf16.msra.mxu0 0
          %1950 = vmatprep.subr.bf16.mxu0 0
          %1951 = vmatpush2.bf16.msra.mxu0 0
          %1952 = vmatprep.subr.bf16.mxu0 0
          %1953 = vmatpush2.bf16.msra.mxu0 0
          %1954 = vmatprep.mubr.bf16.mxu0 0
          %1955 = vmatmul.mubr.bf16.gmra.mxu0 %v1917
          %v1956 = vpop.f32.mrf.mxu0
          %v1957 = vadd.f32 0.0, %v1956
          %v1958 = vpop.f32.mrf.mxu0
          %v1959 = vpop.f32.mrf.mxu0
          %v1960 = vpop.f32.mrf.mxu0
          %1961 = vdwg.mxu0
          %v1962 = vmul.f32 %v1673, %v719
          %v1963 = vmul.f32 %v1675, %v720
          %v1964 = vmul.f32 %v1677, %v721
          %v1965 = vmul.f32 %v1679, %v722
          %v1966 = vadd.f32 %v1962, %v1819
          %v1967 = vadd.f32 %v1963, %v1865
          %v1968 = vadd.f32 %v1964, %v1911
          %v1969 = vadd.f32 %v1965, %v1957
        $region85: #{tpu_custom_call.1} parent=75 // loop_footer
          %s708 = sadd.s32 %s706, 1
        $region86: #{tpu_custom_call.1} parent=75 // loop_footer_branch
          %705 = sbr.rel target = $region82
        $region87: #{tpu_custom_call.1} parent=75 // loop_exit
          _
        %v1970 = vrcp.pop %v715
        %v1971 = vrcp.pop %v716
        %v1972 = vrcp.pop %v717
        %v1973 = vrcp.pop %v718
        %v1974 = vmul.f32 %v719, %v1970
        %v1975 = vmul.f32 %v720, %v1971
        %v1976 = vmul.f32 %v721, %v1972
        %v1977 = vmul.f32 %v722, %v1973
        %v1978 = vcombine.low %v1974, %v1976
        %v1979 = vcombine.high %v1974, %v1976
        %v1981 = vunpack.c.l.s4 1983009808
        %v1982 = vunpack.c.0.s8 %v1981
        %v1983 = vlaneseq
        %v1984 = vshrl.u32 %v1983, 7
        %v1985 = vsub.s32 %v1982, %v1984
        %v1986 = vrot.slane %v1978, %v1985
        %v1988 = vunpack.c.l.s4 1983009808
        %v1989 = vunpack.c.0.s8 %v1988
        %v1990 = vlaneseq
        %v1991 = vshrl.u32 %v1990, 7
        %v1992 = vsub.s32 %v1989, %v1991
        %v1993 = vrot.slane %v1979, %v1992
        %v1994 = vcombine.low %v1975, %v1977
        %v1995 = vcombine.high %v1975, %v1977
        %v1997 = vunpack.c.l.s4 1983009808
        %v1998 = vunpack.c.0.s8 %v1997
        %v1999 = vlaneseq
        %v2000 = vshrl.u32 %v1999, 7
        %v2001 = vsub.s32 %v1998, %v2000
        %v2002 = vrot.slane %v1994, %v2001
        %v2004 = vunpack.c.l.s4 1983009808
        %v2005 = vunpack.c.0.s8 %v2004
        %v2006 = vlaneseq
        %v2007 = vshrl.u32 %v2006, 7
        %v2008 = vsub.s32 %v2005, %v2007
        %v2009 = vrot.slane %v1995, %v2008
        %v2010 = vcombine.low %v1986, %v2002
        %v2011 = vcombine.high %v1986, %v2002
        %v2013 = vunpack.c.l.s4 1934713408
        %v2014 = vunpack.c.0.s8 %v2013
        %v2015 = vlaneseq
        %v2016 = vshrl.u32 %v2015, 7
        %v2017 = vsub.s32 %v2014, %v2016
        %v2018 = vrot.slane %v2010, %v2017
        %v2020 = vunpack.c.l.s4 1934713408
        %v2021 = vunpack.c.0.s8 %v2020
        %v2022 = vlaneseq
        %v2023 = vshrl.u32 %v2022, 7
        %v2024 = vsub.s32 %v2021, %v2023
        %v2025 = vrot.slane %v2011, %v2024
        %v2026 = vcombine.low %v1993, %v2009
        %v2027 = vcombine.high %v1993, %v2009
        %v2029 = vunpack.c.l.s4 1934713408
        %v2030 = vunpack.c.0.s8 %v2029
        %v2031 = vlaneseq
        %v2032 = vshrl.u32 %v2031, 7
        %v2033 = vsub.s32 %v2030, %v2032
        %v2034 = vrot.slane %v2026, %v2033
        %v2036 = vunpack.c.l.s4 1934713408
        %v2037 = vunpack.c.0.s8 %v2036
        %v2038 = vlaneseq
        %v2039 = vshrl.u32 %v2038, 7
        %v2040 = vsub.s32 %v2037, %v2039
        %v2041 = vrot.slane %v2027, %v2040
        %v2042 = vcombine.high %v2018, 0.0
        %v2043 = vcombine.high %v2025, 0.0
        %v2044 = vcombine.high %v2034, 0.0
        %v2045 = vcombine.high %v2041, 0.0
        %v2046 = vcombine.low %v2018, %v2025
        %v2048 = vunpack.c.l.s4 1983009808
        %v2049 = vunpack.c.0.s8 %v2048
        %v2050 = vlaneseq
        %v2051 = vshrl.u32 %v2050, 7
        %v2052 = vsub.s32 %v2049, %v2051
        %v2053 = vrot.slane %v2046, %v2052
        %v2054 = vcombine.low %v2042, %v2043
        %v2056 = vunpack.c.l.s4 1983009808
        %v2057 = vunpack.c.0.s8 %v2056
        %v2058 = vlaneseq
        %v2059 = vshrl.u32 %v2058, 7
        %v2060 = vsub.s32 %v2057, %v2059
        %v2061 = vrot.slane %v2054, %v2060
        %v2062 = vcombine.low %v2034, %v2041
        %v2064 = vunpack.c.l.s4 1983009808
        %v2065 = vunpack.c.0.s8 %v2064
        %v2066 = vlaneseq
        %v2067 = vshrl.u32 %v2066, 7
        %v2068 = vsub.s32 %v2065, %v2067
        %v2069 = vrot.slane %v2062, %v2068
        %v2070 = vcombine.low %v2044, %v2045
        %v2072 = vunpack.c.l.s4 1983009808
        %v2073 = vunpack.c.0.s8 %v2072
        %v2074 = vlaneseq
        %v2075 = vshrl.u32 %v2074, 7
        %v2076 = vsub.s32 %v2073, %v2075
        %v2077 = vrot.slane %v2070, %v2076
        %v2078 = vcombine.low %v2053, %v2061
        %v2079 = vcombine.high %v2053, %v2061
        %v2081 = vunpack.c.l.s4 1934713408
        %v2082 = vunpack.c.0.s8 %v2081
        %v2083 = vlaneseq
        %v2084 = vshrl.u32 %v2083, 7
        %v2085 = vsub.s32 %v2082, %v2084
        %v2086 = vrot.slane %v2078, %v2085
        %v2088 = vunpack.c.l.s4 1934713408
        %v2089 = vunpack.c.0.s8 %v2088
        %v2090 = vlaneseq
        %v2091 = vshrl.u32 %v2090, 7
        %v2092 = vsub.s32 %v2089, %v2091
        %v2093 = vrot.slane %v2079, %v2092
        %v2094 = vcombine.low %v2069, %v2077
        %v2095 = vcombine.high %v2069, %v2077
        %v2097 = vunpack.c.l.s4 1934713408
        %v2098 = vunpack.c.0.s8 %v2097
        %v2099 = vlaneseq
        %v2100 = vshrl.u32 %v2099, 7
        %v2101 = vsub.s32 %v2098, %v2100
        %v2102 = vrot.slane %v2094, %v2101
        %v2104 = vunpack.c.l.s4 1934713408
        %v2105 = vunpack.c.0.s8 %v2104
        %v2106 = vlaneseq
        %v2107 = vshrl.u32 %v2106, 7
        %v2108 = vsub.s32 %v2105, %v2107
        %v2109 = vrot.slane %v2095, %v2108
        %v2110 = vcombine.low %v2086, %v2102
        %v2111 = vcombine.high %v2086, %v2102
        %v2112 = vcombine.low %v2093, %v2109
        %v2113 = vcombine.high %v2093, %v2109
        %2115 = vrot.lane.b32.xlu0 %v2111, 8
        %v2116 = vpop.permute.xlu0 %2115
        %2119 = vrot.lane.b32.xlu0 %v2112, 16
        %v2120 = vpop.permute.xlu0 %2119
        %2123 = vrot.lane.b32.xlu0 %v2113, 24
        %v2124 = vpop.permute.xlu0 %2123
        %vm2126 = vcmask 64512
        %v2127 = vsel %vm2126, %v2110, %v2116
        %vm2128 = vcmask 130048
        %v2129 = vsel %vm2128, %v2127, %v2120
        %vm2130 = vcmask 195584
        %v2131 = vsel %vm2130, %v2129, %v2124
        %v2132 = vpack.c.bf16 %v2131, %v2131
        %v2133 = vld [vmem:[%s4] sm:$0xf]
        %v2134 = vld [vmem:[%s4 + $0x4] sm:$0xf]
        %v2135 = vld [vmem:[%s4 + $0x8] sm:$0xf]
        %v2136 = vld [vmem:[%s4 + $0xc] sm:$0xf]
        %v2137 = vld [vmem:[%s5] sm:$0x1]
        %v2139 = vlaneseq
        %v2140 = vshrl.u32 %v2139, 7
        %v2141 = vsub.s32 0, %v2140
        %v2142 = vrot.slane %v2137, %v2141
        %v2148 = vunpack.c.l.b16 %v2133
        %v2149 = vunpack.c.l.b16 %v2134
        %v2150 = vunpack.c.l.b16 %v2135
        %v2151 = vunpack.c.l.b16 %v2136
        %v2152 = vpack.c.b16 %v2149, %v2148
        %v2153 = vpack.c.b16 %v2151, %v2150
        %v2157 = vsel %vm524, %v2132, 0
        %2159 = vmatprep.subr.bf16.mxu0 0
        %2160 = vmatpush1.bf16.msra.mxu0 0
        %2161 = vmatprep.subr.bf16.mxu0 0
        %2162 = vmatpush1.bf16.msra.mxu0 0
        %2163 = vmatprep.subr.bf16.mxu0 0
        %2164 = vmatpush1.bf16.msra.mxu0 0
        %2165 = vmatprep.subr.bf16.mxu0 0
        %2166 = vmatpush1.bf16.msra.mxu0 0
        %2167 = vmatprep.subr.bf16.mxu0 0
        %2168 = vmatpush1.bf16.msra.mxu0 0
        %2169 = vmatprep.subr.bf16.mxu0 0
        %2170 = vmatpush1.bf16.msra.mxu0 0
        %2171 = vmatprep.subr.bf16.mxu0 0
        %2172 = vmatpush1.bf16.msra.mxu0 %v2153
        %2173 = vmatprep.subr.bf16.mxu0 0
        %2174 = vmatpush1.bf16.msra.mxu0 %v2152
        %2175 = vmatprep.subr.bf16.mxu0 0
        %2176 = vmatpush2.bf16.msra.mxu0 0
        %2177 = vmatprep.subr.bf16.mxu0 0
        %2178 = vmatpush2.bf16.msra.mxu0 0
        %2179 = vmatprep.subr.bf16.mxu0 0
        %2180 = vmatpush2.bf16.msra.mxu0 0
        %2181 = vmatprep.subr.bf16.mxu0 0
        %2182 = vmatpush2.bf16.msra.mxu0 0
        %2183 = vmatprep.subr.bf16.mxu0 0
        %2184 = vmatpush2.bf16.msra.mxu0 0
        %2185 = vmatprep.subr.bf16.mxu0 0
        %2186 = vmatpush2.bf16.msra.mxu0 0
        %2187 = vmatprep.subr.bf16.mxu0 0
        %2188 = vmatpush2.bf16.msra.mxu0 0
        %2189 = vmatprep.subr.bf16.mxu0 0
        %2190 = vmatpush2.bf16.msra.mxu0 0
        %2191 = vmatprep.mubr.bf16.mxu0 0
        %2192 = vmatmul.mubr.bf16.gmra.mxu0 %v2157
        %v2193 = vpop.f32.mrf.mxu0
        %v2194 = vadd.f32 %v2142, %v2193
        %v2195 = vpop.f32.mrf.mxu0
        %v2196 = vpop.f32.mrf.mxu0
        %v2197 = vpop.f32.mrf.mxu0
        %2198 = vdwg.mxu0
        %v2199 = vadd.f32 %v521, %v2194
        %v2200 = vld [vmem:[%s12] sm:$0x1]
        %v2201 = vld [vmem:[%s13] sm:$0x1]
        %v2202 = vsel %vm524, %v2199, 0.0
        %2203 = vadd.xlane.f32.xlu0 %v2202
        %v2204 = vpop.xlane.xlu0 %2203
        %v2205 = vmul.f32 %v2204, %v528
        %v2206 = vsub.f32 %v2199, %v2205
        %v2207 = vmul.f32 %v2206, %v2206
        %v2208 = vsel %vm524, %v2207, 0.0
        %2209 = vadd.xlane.f32.xlu0 %v2208
        %v2210 = vpop.xlane.xlu0 %2209
        %v2211 = vmul.f32 %v2210, %v528
        %v2212 = vadd.f32 %v2211, 1e-05
        %v2213 = vrsqrt.pop %v2212
        %v2214 = vmul.f32 %v2206, %v2213
        %v2216 = vlaneseq
        %v2217 = vshrl.u32 %v2216, 7
        %v2218 = vsub.s32 0, %v2217
        %v2219 = vrot.slane %v2200, %v2218
        %v2221 = vmul.f32 %v2214, %v2219
        %v2223 = vlaneseq
        %v2224 = vshrl.u32 %v2223, 7
        %v2225 = vsub.s32 0, %v2224
        %v2226 = vrot.slane %v2201, %v2225
        %v2228 = vadd.f32 %v2221, %v2226
        %v2229 = vpack.c.bf16 %v2228, %v2228
        %v2230 = vld [vmem:[#allocation2] sm:$0xf]
        %v2231 = vld [vmem:[#allocation2 + $0x4] sm:$0xf]
        %v2232 = vld [vmem:[#allocation2 + $0x8] sm:$0xf]
        %v2233 = vld [vmem:[#allocation2 + $0xc] sm:$0xf]
        %v2234 = vld [vmem:[%s7] sm:$0x1]
        %v2236 = vlaneseq
        %v2237 = vshrl.u32 %v2236, 7
        %v2238 = vsub.s32 0, %v2237
        %v2239 = vrot.slane %v2234, %v2238
        %v2245 = vunpack.c.l.b16 %v2230
        %v2246 = vunpack.c.l.b16 %v2231
        %v2247 = vunpack.c.l.b16 %v2232
        %v2248 = vunpack.c.l.b16 %v2233
        %v2249 = vpack.c.b16 %v2246, %v2245
        %v2250 = vpack.c.b16 %v2248, %v2247
        %v2254 = vsel %vm524, %v2229, 0
        %2256 = vmatprep.subr.bf16.mxu0 0
        %2257 = vmatpush1.bf16.msra.mxu0 0
        %2258 = vmatprep.subr.bf16.mxu0 0
        %2259 = vmatpush1.bf16.msra.mxu0 0
        %2260 = vmatprep.subr.bf16.mxu0 0
        %2261 = vmatpush1.bf16.msra.mxu0 0
        %2262 = vmatprep.subr.bf16.mxu0 0
        %2263 = vmatpush1.bf16.msra.mxu0 0
        %2264 = vmatprep.subr.bf16.mxu0 0
        %2265 = vmatpush1.bf16.msra.mxu0 0
        %2266 = vmatprep.subr.bf16.mxu0 0
        %2267 = vmatpush1.bf16.msra.mxu0 0
        %2268 = vmatprep.subr.bf16.mxu0 0
        %2269 = vmatpush1.bf16.msra.mxu0 %v2250
        %2270 = vmatprep.subr.bf16.mxu0 0
        %2271 = vmatpush1.bf16.msra.mxu0 %v2249
        %2272 = vmatprep.subr.bf16.mxu0 0
        %2273 = vmatpush2.bf16.msra.mxu0 0
        %2274 = vmatprep.subr.bf16.mxu0 0
        %2275 = vmatpush2.bf16.msra.mxu0 0
        %2276 = vmatprep.subr.bf16.mxu0 0
        %2277 = vmatpush2.bf16.msra.mxu0 0
        %2278 = vmatprep.subr.bf16.mxu0 0
        %2279 = vmatpush2.bf16.msra.mxu0 0
        %2280 = vmatprep.subr.bf16.mxu0 0
        %2281 = vmatpush2.bf16.msra.mxu0 0
        %2282 = vmatprep.subr.bf16.mxu0 0
        %2283 = vmatpush2.bf16.msra.mxu0 0
        %2284 = vmatprep.subr.bf16.mxu0 0
        %2285 = vmatpush2.bf16.msra.mxu0 0
        %2286 = vmatprep.subr.bf16.mxu0 0
        %2287 = vmatpush2.bf16.msra.mxu0 0
        %2288 = vmatprep.mubr.bf16.mxu0 0
        %2289 = vmatmul.mubr.bf16.gmra.mxu0 %v2254
        %v2290 = vpop.f32.mrf.mxu0
        %v2291 = vadd.f32 %v2239, %v2290
        %v2292 = vpop.f32.mrf.mxu0
        %v2293 = vpop.f32.mrf.mxu0
        %v2294 = vpop.f32.mrf.mxu0
        %2295 = vdwg.mxu0
        %v2296 = vmax.f32 %v2291, 0.0
        %v2297 = vpack.c.bf16 %v2296, %v2296
        %v2298 = vld [vmem:[%s8] sm:$0xf]
        %v2299 = vld [vmem:[%s8 + $0x4] sm:$0xf]
        %v2300 = vld [vmem:[%s8 + $0x8] sm:$0xf]
        %v2301 = vld [vmem:[%s8 + $0xc] sm:$0xf]
        %v2302 = vld [vmem:[%s8 + $0x10] sm:$0xf]
        %v2303 = vld [vmem:[%s8 + $0x14] sm:$0xf]
        %v2304 = vld [vmem:[%s8 + $0x18] sm:$0xf]
        %v2305 = vld [vmem:[%s8 + $0x1c] sm:$0xf]
        %v2306 = vld [vmem:[%s8 + $0x20] sm:$0xf]
        %v2307 = vld [vmem:[%s8 + $0x24] sm:$0xf]
        %v2308 = vld [vmem:[%s8 + $0x28] sm:$0xf]
        %v2309 = vld [vmem:[%s8 + $0x2c] sm:$0xf]
        %v2310 = vld [vmem:[%s8 + $0x30] sm:$0xf]
        %v2311 = vld [vmem:[%s8 + $0x34] sm:$0xf]
        %v2312 = vld [vmem:[%s8 + $0x38] sm:$0xf]
        %v2313 = vld [vmem:[%s8 + $0x3c] sm:$0xf]
        %v2314 = vld [vmem:[%s9] sm:$0x1]
        %v2316 = vlaneseq
        %v2317 = vshrl.u32 %v2316, 7
        %v2318 = vsub.s32 0, %v2317
        %v2319 = vrot.slane %v2314, %v2318
        %v2337 = vunpack.c.l.b16 %v2298
        %v2338 = vunpack.c.l.b16 %v2299
        %v2339 = vunpack.c.l.b16 %v2300
        %v2340 = vunpack.c.l.b16 %v2301
        %v2341 = vunpack.c.l.b16 %v2302
        %v2342 = vunpack.c.l.b16 %v2303
        %v2343 = vunpack.c.l.b16 %v2304
        %v2344 = vunpack.c.l.b16 %v2305
        %v2345 = vunpack.c.l.b16 %v2306
        %v2346 = vunpack.c.l.b16 %v2307
        %v2347 = vunpack.c.l.b16 %v2308
        %v2348 = vunpack.c.l.b16 %v2309
        %v2349 = vunpack.c.l.b16 %v2310
        %v2350 = vunpack.c.l.b16 %v2311
        %v2351 = vunpack.c.l.b16 %v2312
        %v2352 = vunpack.c.l.b16 %v2313
        %v2353 = vpack.c.b16 %v2338, %v2337
        %v2354 = vpack.c.b16 %v2340, %v2339
        %v2355 = vpack.c.b16 %v2342, %v2341
        %v2356 = vpack.c.b16 %v2344, %v2343
        %v2357 = vpack.c.b16 %v2346, %v2345
        %v2358 = vpack.c.b16 %v2348, %v2347
        %v2359 = vpack.c.b16 %v2350, %v2349
        %v2360 = vpack.c.b16 %v2352, %v2351
        %2369 = vmatprep.subr.bf16.mxu0 0
        %2370 = vmatpush1.bf16.msra.mxu0 %v2360
        %2371 = vmatprep.subr.bf16.mxu0 0
        %2372 = vmatpush1.bf16.msra.mxu0 %v2359
        %2373 = vmatprep.subr.bf16.mxu0 0
        %2374 = vmatpush1.bf16.msra.mxu0 %v2358
        %2375 = vmatprep.subr.bf16.mxu0 0
        %2376 = vmatpush1.bf16.msra.mxu0 %v2357
        %2377 = vmatprep.subr.bf16.mxu0 0
        %2378 = vmatpush1.bf16.msra.mxu0 %v2356
        %2379 = vmatprep.subr.bf16.mxu0 0
        %2380 = vmatpush1.bf16.msra.mxu0 %v2355
        %2381 = vmatprep.subr.bf16.mxu0 0
        %2382 = vmatpush1.bf16.msra.mxu0 %v2354
        %2383 = vmatprep.subr.bf16.mxu0 0
        %2384 = vmatpush1.bf16.msra.mxu0 %v2353
        %2385 = vmatprep.subr.bf16.mxu0 0
        %2386 = vmatpush2.bf16.msra.mxu0 0
        %2387 = vmatprep.subr.bf16.mxu0 0
        %2388 = vmatpush2.bf16.msra.mxu0 0
        %2389 = vmatprep.subr.bf16.mxu0 0
        %2390 = vmatpush2.bf16.msra.mxu0 0
        %2391 = vmatprep.subr.bf16.mxu0 0
        %2392 = vmatpush2.bf16.msra.mxu0 0
        %2393 = vmatprep.subr.bf16.mxu0 0
        %2394 = vmatpush2.bf16.msra.mxu0 0
        %2395 = vmatprep.subr.bf16.mxu0 0
        %2396 = vmatpush2.bf16.msra.mxu0 0
        %2397 = vmatprep.subr.bf16.mxu0 0
        %2398 = vmatpush2.bf16.msra.mxu0 0
        %2399 = vmatprep.subr.bf16.mxu0 0
        %2400 = vmatpush2.bf16.msra.mxu0 0
        %2401 = vmatprep.mubr.bf16.mxu0 0
        %2402 = vmatmul.mubr.bf16.gmra.mxu0 %v2297
        %v2403 = vpop.f32.mrf.mxu0
        %v2404 = vadd.f32 %v2319, %v2403
        %v2405 = vpop.f32.mrf.mxu0
        %v2406 = vpop.f32.mrf.mxu0
        %v2407 = vpop.f32.mrf.mxu0
        %2408 = vdwg.mxu0
        %v2409 = vadd.f32 %v2199, %v2404
        %2410 = vst.msk [vmem:[%s508] sm:$0xff] %vm524, %v2409
        %s2411 = sand.u32 %s357, 1
        %s2412 = scalar_lea.sflag [#allocation4], %s2411
        %s2413 = sand.u32 %s357, 1
        %s2414 = smul.addr %s2413, 8
        %s2415 = scalar_lea.vmem [#allocation5], %s2414
        // Predicated region
        $region88: #{tpu_custom_call.1} parent=75 // pred_check
          %p2416 = pneg %p367
        $region89: #{tpu_custom_call.1} parent=75 // pred_check_branch
          %2418 = sbr.rel (%p2416) target = $region91
        $region90: #{tpu_custom_call.1} parent=75 // pred_region
          %s2420 = ssub.s32 128, 128
          %2421 = vsyncadd %s2412, %s2420
          %s2422 = sadd.s32 %s34, %s33
          %s2423 = smul.addr %s2422, 128
          %s2424 = scalar_lea.hbm %s14, %s2423
          %s2426 = sshll.u32 %s2415, 4
          %s2427 = int_to_ptr.vmem [resolvable:$true] %s2426
          %2429 = dma.vmem_to_hbm [thread:$0]  %s2427, 128, %s2424, %s2412
        $region91: #{tpu_custom_call.1} parent=75 // pred_fallthru
          _
      $region76: #{tpu_custom_call.1} parent=5 // pred_fallthru
        _
      %p2430 = scmp.le.s32.totalorder 2, %s24
      // Predicated region
      $region92: #{tpu_custom_call.1} parent=5 // pred_check
        %p2431 = pneg %p2430
      $region93: #{tpu_custom_call.1} parent=5 // pred_check_branch
        %2433 = sbr.rel (%p2431) target = $region95
      $region94: #{tpu_custom_call.1} parent=5 // pred_region
        %s2434 = ssub.s32 %s24, 2
        // Predicated region
        $region96: #{tpu_custom_call.1} parent=94 // pred_check
          %p2435 = pneg %p373
        $region97: #{tpu_custom_call.1} parent=94 // pred_check_branch
          %2437 = sbr.rel (%p2435) target = $region99
        $region98: #{tpu_custom_call.1} parent=94 // pred_region
          %s2438 = sand.u32 %s358, 1
          %s2439 = scalar_lea.sflag [#allocation4], %s2438
          %s2440 = sand.u32 %s358, 1
          %s2441 = smul.addr %s2440, 8
          %s2442 = scalar_lea.vmem [#allocation5], %s2441
          %2443 = dma.done %s2439, 128
        $region99: #{tpu_custom_call.1} parent=94 // pred_fallthru
          _
      $region95: #{tpu_custom_call.1} parent=5 // pred_fallthru
        _
    $region6: #{tpu_custom_call.1} parent=1 // loop_footer
      %s28 = sadd.s32 1, %s24
    $region7: #{tpu_custom_call.1} parent=1 // loop_footer_branch
      %23 = sbr.rel target = $region3
    $region8: #{tpu_custom_call.1} parent=1 // loop_exit
      _
    %2444 = vsyncpa [#allocation3], 1
    %s2445 = scalar_lea.sflag [#allocation3], 1
    %2446 = vsyncpa %s2445, 1
    %2447 = vsyncpa [#allocation4], 1
    %s2448 = scalar_lea.sflag [#allocation4], 1
    %2449 = vsyncpa %s2448, 1

</llo_original>
